<compile_context>
chip_gen: v5e
topology: v5e:2x2
jax: 0.10.0
libtpu: 0.0.40
codegen_flags: <defaults>
</compile_context>

<pallas_src>
import functools
import math

import jax
import jax.numpy as jnp
from jax import lax
from jax.experimental import pallas as pl
from jax.experimental.pallas import tpu as pltpu

BN_EPS = 1e-5


# ---------------------------------------------------------------------------
# Fused kernel: one batch image per grid step.
#   x_ref : (1, H, W, Cin)      f32   input image (NHWC)
#   s1/b1 : (1, Cin)            f32   BN1 folded scale / bias
#   w1    : (Cin, Cmid)         bf16  1x1 weight with BN2 scale folded in
#   b2    : (1, Cmid)           f32   BN2 folded bias
#   w3    : (3, 3, Cmid, G)     bf16  grouped 3x3 baked block-diagonal dense
#   o_ref : (1, H, W, Cin+G)    f32   [x | conv output] (fused concat)
#   hp_ref: (H+2, W+2, Cmid)    f32   VMEM scratch, zero-padded activation
# ---------------------------------------------------------------------------
def _dense_layer_kernel(x_ref, s1_ref, b1_ref, w1_ref, b2_ref, w3_ref,
                        o_ref, hp_ref, *, H, W, Cin, Cmid, G):
    # ---- stage 1: BN1 + ReLU + 1x1 conv (BN2 scale pre-folded) + bias + ReLU ----
    x = x_ref[0]                                                 # (H, W, Cin) f32
    a = jnp.maximum(x.reshape(H * W, Cin) * s1_ref[...] + b1_ref[...], 0.0)
    z = jnp.dot(a.astype(jnp.bfloat16), w1_ref[...],
                preferred_element_type=jnp.float32)              # bf16 MXU -> f32
    h = jnp.maximum(z + b2_ref[...], 0.0)                        # (H*W, Cmid) f32

    # ---- zero-pad h into VMEM scratch (padding after ReLU -> zeros are exact) ----
    hp_ref[...] = jnp.zeros_like(hp_ref)                         # cheap VMEM memset
    hp_ref[1:H + 1, 1:W + 1, :] = h.reshape(H, W, Cmid)

    # ---- stage 2: 3x3 conv as 9 shifted matmuls, f32 accumulation ----
    acc = jnp.zeros((H * W, G), jnp.float32)
    for dy in range(3):
        for dx in range(3):
            patch = hp_ref[dy:dy + H, dx:dx + W, :].reshape(H * W, Cmid)
            acc = acc + jnp.dot(patch.astype(jnp.bfloat16), w3_ref[dy, dx],
                                preferred_element_type=jnp.float32)

    # ---- fused dense-connection concat: write [x | y] into the output slab ----
    o_ref[0, :, :, :Cin] = x
    o_ref[0, :, :, Cin:] = acc.reshape(H, W, G).astype(o_ref.dtype)


# ---------------------------------------------------------------------------
# Wrapper (public interface stays NCHW = PyTorch convention; transposes are glue
# that disappear in a real NHWC pipeline).
# ---------------------------------------------------------------------------
def dense_layer_forward(x_nchw, params):
    N, Cin, H, W = x_nchw.shape
    Cmid = params["w1"].shape[1]
    G = params["w3"].shape[-1]

    x = jnp.transpose(x_nchw, (0, 2, 3, 1))                      # -> NHWC

    out_nhwc = pl.pallas_call(
        functools.partial(_dense_layer_kernel, H=H, W=W, Cin=Cin, Cmid=Cmid, G=G),
        out_shape=jax.ShapeDtypeStruct((N, H, W, Cin + G), jnp.float32),
        grid_spec=pltpu.PrefetchScalarGridSpec(
            num_scalar_prefetch=0,
            grid=(N,),
            in_specs=[
                pl.BlockSpec((1, H, W, Cin), lambda n: (n, 0, 0, 0)),
                pl.BlockSpec((1, Cin), lambda n: (0, 0)),
                pl.BlockSpec((1, Cin), lambda n: (0, 0)),
                pl.BlockSpec((Cin, Cmid), lambda n: (0, 0)),
                pl.BlockSpec((1, Cmid), lambda n: (0, 0)),
                pl.BlockSpec((3, 3, Cmid, G), lambda n: (0, 0, 0, 0)),
            ],
            out_specs=pl.BlockSpec((1, H, W, Cin + G), lambda n: (n, 0, 0, 0)),
            scratch_shapes=[pltpu.VMEM((H + 2, W + 2, Cmid), jnp.float32)],
        ),
        compiler_params=pltpu.CompilerParams(dimension_semantics=("parallel",)),
    )(x, params["s1"], params["b1"], params["w1"], params["b2"], params["w3"])

    return jnp.transpose(out_nhwc, (0, 3, 1, 2))                 # -> NCHW


# ---------------------------------------------------------------------------
# Deterministic parameter construction (shapes dictated by the module).
# ---------------------------------------------------------------------------
def init_params(key, in_channels, growth_rate, *, bottleneck=4,
                group_1x1=4, group_3x3=4, condense_factor=4, dropout_rate=0.0):
    del group_1x1, condense_factor, dropout_rate   # inference path, mask == ones
    Cmid = bottleneck * growth_rate
    ks = jax.random.split(key, 10)

    def bn(kg, kb, km, kv, c):
        gamma = jax.random.uniform(kg, (c,), minval=0.5, maxval=1.5)
        beta = jax.random.normal(kb, (c,)) * 0.1
        mean = jax.random.normal(km, (c,)) * 0.1
        var = jax.random.uniform(kv, (c,), minval=0.5, maxval=1.5)
        scale = gamma / jnp.sqrt(var + BN_EPS)
        bias = beta - mean * scale
        return scale.astype(jnp.float32), bias.astype(jnp.float32)

    s1, b1 = bn(ks[0], ks[1], ks[2], ks[3], in_channels)
    s2, b2 = bn(ks[4], ks[5], ks[6], ks[7], Cmid)

    # LearnedGroupConv 1x1 weight (OIHW), mask == ones at fresh init.
    w1_oihw = (jax.random.normal(ks[8], (Cmid, in_channels, 1, 1), jnp.float32)
               * (1.0 / math.sqrt(in_channels)))
    w1 = jnp.transpose(w1_oihw[:, :, 0, 0], (1, 0))              # (Cin, Cmid) f32
    # Fold BN2 scale into the 1x1 weight (exact in f32), then quantize once to bf16.
    w1_eff = (w1 * s2[None, :]).astype(jnp.bfloat16)

    # Grouped 3x3 conv weight (growth, Cmid/groups, 3, 3), baked block-diagonal dense.
    # TODO(synk): at realistic widths keep an explicit group axis instead (here 75% of
    #             the tiny MXU tap multiplies structural zeros, which is irrelevant).
    cin_g = Cmid // group_3x3
    cout_g = growth_rate // group_3x3
    w3_oihw = (jax.random.normal(ks[9], (growth_rate, cin_g, 3, 3), jnp.float32)
               * (1.0 / math.sqrt(cin_g * 9)))
    w3_dense = jnp.zeros((3, 3, Cmid, growth_rate), jnp.float32)
    for g in range(group_3x3):
        blk = w3_oihw[g * cout_g:(g + 1) * cout_g]               # (cout_g, cin_g, 3, 3)
        w3_dense = w3_dense.at[:, :, g * cin_g:(g + 1) * cin_g,
                               g * cout_g:(g + 1) * cout_g].set(
            jnp.transpose(blk, (2, 3, 1, 0)))

    params = dict(s1=s1[None], b1=b1[None], w1=w1_eff,
                  b2=b2[None], w3=w3_dense.astype(jnp.bfloat16))
    raw = dict(s1=s1, b1=b1, w1_eff=w1_eff, b2=b2,
               w3_oihw=w3_oihw.astype(jnp.bfloat16), groups=group_3x3)
    return params, raw


# ---------------------------------------------------------------------------
# Reference (pure JAX, NCHW). Uses the SAME bf16 effective weights / activation
# casts as the kernel so the comparison only differs by accumulation order; the
# grouped 3x3 is done with feature_group_count, independently checking the
# block-diagonal baking and the zero padding.
# ---------------------------------------------------------------------------
def reference_forward(x_nchw, raw):
    s1, b1, b2 = raw["s1"], raw["b1"], raw["b2"]
    a = jnp.maximum(x_nchw * s1[None, :, None, None] + b1[None, :, None, None], 0.0)
    w1_oihw = jnp.transpose(raw["w1_eff"], (1, 0))[:, :, None, None]   # (Cmid,Cin,1,1) bf16
    z = lax.conv_general_dilated(a.astype(jnp.bfloat16), w1_oihw, (1, 1), "VALID",
                                 dimension_numbers=("NCHW", "OIHW", "NCHW"),
                                 preferred_element_type=jnp.float32)
    h = jnp.maximum(z + b2[None, :, None, None], 0.0)
    y = lax.conv_general_dilated(h.astype(jnp.bfloat16), raw["w3_oihw"], (1, 1),
                                 ((1, 1), (1, 1)),
                                 dimension_numbers=("NCHW", "OIHW", "NCHW"),
                                 feature_group_count=raw["groups"],
                                 preferred_element_type=jnp.float32)
    return jnp.concatenate([x_nchw, y], axis=1)


if __name__ == "__main__":
    key = jax.random.PRNGKey(0)
    kx, kp = jax.random.split(key)

    # Small shapes consistent with the module:
    # in_channels=8, growth_rate=8, bottleneck=4 -> 1x1 produces 32 channels.
    N, Cin, H, W = 2, 8, 16, 16
    growth = 8

    x = jax.random.normal(kx, (N, Cin, H, W), jnp.float32)
    params, raw = init_params(kp, Cin, growth, bottleneck=4,
                              group_1x1=4, group_3x3=4, condense_factor=4,
                              dropout_rate=0.0)

    out = jax.block_until_ready(dense_layer_forward(x, params))
    assert out.shape == (N, Cin + growth, H, W), out.shape

    ref = reference_forward(x, raw)
    err = float(jnp.max(jnp.abs(out - ref)))
    assert jnp.allclose(out, ref, atol=1e-2, rtol=1e-2), f"max abs err {err}"

    print("KERNEL_OK")
</pallas_src>

<mosaic_0001>
module attributes {stable_mosaic.version = 11 : i64} {
  func.func @_dense_layer_kernel(%arg0: i32, %arg1: memref<1x16x16x8xf32, #tpu.memory_space<vmem>>, %arg2: memref<1x8xf32, #tpu.memory_space<vmem>>, %arg3: memref<1x8xf32, #tpu.memory_space<vmem>>, %arg4: memref<8x32xbf16, #tpu.memory_space<vmem>>, %arg5: memref<1x32xf32, #tpu.memory_space<vmem>>, %arg6: memref<3x3x32x8xbf16, #tpu.memory_space<vmem>>, %arg7: memref<1x16x16x16xf32, #tpu.memory_space<vmem>>, %arg8: memref<18x18x32xf32, #tpu.memory_space<vmem>>) attributes {dimension_semantics = [#tpu.dimension_semantics<parallel>], iteration_bounds = array<i64: 2>, scalar_prefetch = 0 : i64, scratch_operands = 1 : i64, tpu.core_type = #tpu.core_type<tc>, window_params = [{transform_indices = @transform_0, window_bounds = array<i64: 1, 16, 16, 8>}, {pipeline_mode = #tpu.pipeline_mode<synchronous>, transform_indices = @transform_1, window_bounds = array<i64: 1, 8>}, {pipeline_mode = #tpu.pipeline_mode<synchronous>, transform_indices = @transform_2, window_bounds = array<i64: 1, 8>}, {pipeline_mode = #tpu.pipeline_mode<synchronous>, transform_indices = @transform_3, window_bounds = array<i64: 8, 32>}, {pipeline_mode = #tpu.pipeline_mode<synchronous>, transform_indices = @transform_4, window_bounds = array<i64: 1, 32>}, {pipeline_mode = #tpu.pipeline_mode<synchronous>, transform_indices = @transform_5, window_bounds = array<i64: 3, 3, 32, 8>}, {transform_indices = @transform_6, window_bounds = array<i64: 1, 16, 16, 16>}]} {
    %c0 = arith.constant 0 : index
    %c0_0 = arith.constant 0 : index
    %c0_1 = arith.constant 0 : index
    %c0_2 = arith.constant 0 : index
    %0 = vector.load %arg1[%c0, %c0_0, %c0_1, %c0_2] : memref<1x16x16x8xf32, #tpu.memory_space<vmem>>, vector<1x16x16x8xf32>
    %1 = vector.shape_cast %0 : vector<1x16x16x8xf32> to vector<16x16x8xf32>
    %2 = vector.shape_cast %1 : vector<16x16x8xf32> to vector<256x8xf32>
    %c0_3 = arith.constant 0 : index
    %c0_4 = arith.constant 0 : index
    %3 = vector.load %arg2[%c0_3, %c0_4] : memref<1x8xf32, #tpu.memory_space<vmem>>, vector<1x8xf32>
    %4 = vector.broadcast %3 : vector<1x8xf32> to vector<256x8xf32>
    %5 = arith.mulf %2, %4 : vector<256x8xf32>
    %c0_5 = arith.constant 0 : index
    %c0_6 = arith.constant 0 : index
    %6 = vector.load %arg3[%c0_5, %c0_6] : memref<1x8xf32, #tpu.memory_space<vmem>>, vector<1x8xf32>
    %7 = vector.broadcast %6 : vector<1x8xf32> to vector<256x8xf32>
    %8 = arith.addf %5, %7 : vector<256x8xf32>
    %cst = arith.constant 0.000000e+00 : f32
    %9 = vector.broadcast %cst : f32 to vector<256x8xf32>
    %10 = arith.maximumf %8, %9 : vector<256x8xf32>
    %11 = arith.truncf %10 : vector<256x8xf32> to vector<256x8xbf16>
    %c0_7 = arith.constant 0 : index
    %c0_8 = arith.constant 0 : index
    %12 = vector.load %arg4[%c0_7, %c0_8] : memref<8x32xbf16, #tpu.memory_space<vmem>>, vector<8x32xbf16>
    %cst_9 = arith.constant dense<0.000000e+00> : vector<256x32xf32>
    %13 = tpu.matmul %11, %12, %cst_9 {dimension_numbers = #tpu.dot_dimension_numbers<[1], [0], [0], [1], [0, 0, 1, 1], [], []>} : vector<256x8xbf16>, vector<8x32xbf16>, vector<256x32xf32> -> vector<256x32xf32>
    %c0_10 = arith.constant 0 : index
    %c0_11 = arith.constant 0 : index
    %14 = vector.load %arg5[%c0_10, %c0_11] : memref<1x32xf32, #tpu.memory_space<vmem>>, vector<1x32xf32>
    %15 = vector.broadcast %14 : vector<1x32xf32> to vector<256x32xf32>
    %16 = arith.addf %13, %15 : vector<256x32xf32>
    %cst_12 = arith.constant 0.000000e+00 : f32
    %17 = vector.broadcast %cst_12 : f32 to vector<256x32xf32>
    %18 = arith.maximumf %16, %17 : vector<256x32xf32>
    %cst_13 = arith.constant 0.000000e+00 : f32
    %19 = vector.broadcast %cst_13 : f32 to vector<18x18x32xf32>
    %c0_14 = arith.constant 0 : index
    %c0_15 = arith.constant 0 : index
    %c0_16 = arith.constant 0 : index
    %20 = vector.load %arg8[%c0_14, %c0_15, %c0_16] : memref<18x18x32xf32, #tpu.memory_space<vmem>>, vector<18x18x32xf32>
    tpu.vector_store %arg8[%c0_14, %c0_15, %c0_16], %19 {strides = array<i32>} : memref<18x18x32xf32, #tpu.memory_space<vmem>>, vector<18x18x32xf32>,
    %21 = vector.shape_cast %18 : vector<256x32xf32> to vector<16x16x32xf32>
    %c1 = arith.constant 1 : index
    %c1_17 = arith.constant 1 : index
    %c0_18 = arith.constant 0 : index
    %22 = vector.load %arg8[%c1, %c1_17, %c0_18] : memref<18x18x32xf32, #tpu.memory_space<vmem>>, vector<16x16x32xf32>
    tpu.vector_store %arg8[%c1, %c1_17, %c0_18], %21 {strides = array<i32>} : memref<18x18x32xf32, #tpu.memory_space<vmem>>, vector<16x16x32xf32>,
    %cst_19 = arith.constant 0.000000e+00 : f32
    %23 = vector.broadcast %cst_19 : f32 to vector<256x8xf32>
    %c0_20 = arith.constant 0 : index
    %c0_21 = arith.constant 0 : index
    %c0_22 = arith.constant 0 : index
    %24 = vector.load %arg8[%c0_20, %c0_21, %c0_22] : memref<18x18x32xf32, #tpu.memory_space<vmem>>, vector<16x16x32xf32>
    %25 = vector.shape_cast %24 : vector<16x16x32xf32> to vector<256x32xf32>
    %26 = arith.truncf %25 : vector<256x32xf32> to vector<256x32xbf16>
    %c0_23 = arith.constant 0 : index
    %c0_24 = arith.constant 0 : index
    %c0_25 = arith.constant 0 : index
    %c0_26 = arith.constant 0 : index
    %27 = vector.load %arg6[%c0_23, %c0_24, %c0_25, %c0_26] : memref<3x3x32x8xbf16, #tpu.memory_space<vmem>>, vector<1x1x32x8xbf16>
    %28 = vector.shape_cast %27 : vector<1x1x32x8xbf16> to vector<32x8xbf16>
    %cst_27 = arith.constant dense<0.000000e+00> : vector<256x8xf32>
    %29 = tpu.matmul %26, %28, %cst_27 {dimension_numbers = #tpu.dot_dimension_numbers<[1], [0], [0], [1], [0, 0, 1, 1], [], []>} : vector<256x32xbf16>, vector<32x8xbf16>, vector<256x8xf32> -> vector<256x8xf32>
    %30 = arith.addf %23, %29 : vector<256x8xf32>
    %c0_28 = arith.constant 0 : index
    %c1_29 = arith.constant 1 : index
    %c0_30 = arith.constant 0 : index
    %31 = vector.load %arg8[%c0_28, %c1_29, %c0_30] : memref<18x18x32xf32, #tpu.memory_space<vmem>>, vector<16x16x32xf32>
    %32 = vector.shape_cast %31 : vector<16x16x32xf32> to vector<256x32xf32>
    %33 = arith.truncf %32 : vector<256x32xf32> to vector<256x32xbf16>
    %c0_31 = arith.constant 0 : index
    %c1_32 = arith.constant 1 : index
    %c0_33 = arith.constant 0 : index
    %c0_34 = arith.constant 0 : index
    %34 = vector.load %arg6[%c0_31, %c1_32, %c0_33, %c0_34] : memref<3x3x32x8xbf16, #tpu.memory_space<vmem>>, vector<1x1x32x8xbf16>
    %35 = vector.shape_cast %34 : vector<1x1x32x8xbf16> to vector<32x8xbf16>
    %cst_35 = arith.constant dense<0.000000e+00> : vector<256x8xf32>
    %36 = tpu.matmul %33, %35, %cst_35 {dimension_numbers = #tpu.dot_dimension_numbers<[1], [0], [0], [1], [0, 0, 1, 1], [], []>} : vector<256x32xbf16>, vector<32x8xbf16>, vector<256x8xf32> -> vector<256x8xf32>
    %37 = arith.addf %30, %36 : vector<256x8xf32>
    %c0_36 = arith.constant 0 : index
    %c2 = arith.constant 2 : index
    %c0_37 = arith.constant 0 : index
    %38 = vector.load %arg8[%c0_36, %c2, %c0_37] : memref<18x18x32xf32, #tpu.memory_space<vmem>>, vector<16x16x32xf32>
    %39 = vector.shape_cast %38 : vector<16x16x32xf32> to vector<256x32xf32>
    %40 = arith.truncf %39 : vector<256x32xf32> to vector<256x32xbf16>
    %c0_38 = arith.constant 0 : index
    %c2_39 = arith.constant 2 : index
    %c0_40 = arith.constant 0 : index
    %c0_41 = arith.constant 0 : index
    %41 = vector.load %arg6[%c0_38, %c2_39, %c0_40, %c0_41] : memref<3x3x32x8xbf16, #tpu.memory_space<vmem>>, vector<1x1x32x8xbf16>
    %42 = vector.shape_cast %41 : vector<1x1x32x8xbf16> to vector<32x8xbf16>
    %cst_42 = arith.constant dense<0.000000e+00> : vector<256x8xf32>
    %43 = tpu.matmul %40, %42, %cst_42 {dimension_numbers = #tpu.dot_dimension_numbers<[1], [0], [0], [1], [0, 0, 1, 1], [], []>} : vector<256x32xbf16>, vector<32x8xbf16>, vector<256x8xf32> -> vector<256x8xf32>
    %44 = arith.addf %37, %43 : vector<256x8xf32>
    %c1_43 = arith.constant 1 : index
    %c0_44 = arith.constant 0 : index
    %c0_45 = arith.constant 0 : index
    %45 = vector.load %arg8[%c1_43, %c0_44, %c0_45] : memref<18x18x32xf32, #tpu.memory_space<vmem>>, vector<16x16x32xf32>
    %46 = vector.shape_cast %45 : vector<16x16x32xf32> to vector<256x32xf32>
    %47 = arith.truncf %46 : vector<256x32xf32> to vector<256x32xbf16>
    %c1_46 = arith.constant 1 : index
    %c0_47 = arith.constant 0 : index
    %c0_48 = arith.constant 0 : index
    %c0_49 = arith.constant 0 : index
    %48 = vector.load %arg6[%c1_46, %c0_47, %c0_48, %c0_49] : memref<3x3x32x8xbf16, #tpu.memory_space<vmem>>, vector<1x1x32x8xbf16>
    %49 = vector.shape_cast %48 : vector<1x1x32x8xbf16> to vector<32x8xbf16>
    %cst_50 = arith.constant dense<0.000000e+00> : vector<256x8xf32>
    %50 = tpu.matmul %47, %49, %cst_50 {dimension_numbers = #tpu.dot_dimension_numbers<[1], [0], [0], [1], [0, 0, 1, 1], [], []>} : vector<256x32xbf16>, vector<32x8xbf16>, vector<256x8xf32> -> vector<256x8xf32>
    %51 = arith.addf %44, %50 : vector<256x8xf32>
    %c1_51 = arith.constant 1 : index
    %c1_52 = arith.constant 1 : index
    %c0_53 = arith.constant 0 : index
    %52 = vector.load %arg8[%c1_51, %c1_52, %c0_53] : memref<18x18x32xf32, #tpu.memory_space<vmem>>, vector<16x16x32xf32>
    %53 = vector.shape_cast %52 : vector<16x16x32xf32> to vector<256x32xf32>
    %54 = arith.truncf %53 : vector<256x32xf32> to vector<256x32xbf16>
    %c1_54 = arith.constant 1 : index
    %c1_55 = arith.constant 1 : index
    %c0_56 = arith.constant 0 : index
    %c0_57 = arith.constant 0 : index
    %55 = vector.load %arg6[%c1_54, %c1_55, %c0_56, %c0_57] : memref<3x3x32x8xbf16, #tpu.memory_space<vmem>>, vector<1x1x32x8xbf16>
    %56 = vector.shape_cast %55 : vector<1x1x32x8xbf16> to vector<32x8xbf16>
    %cst_58 = arith.constant dense<0.000000e+00> : vector<256x8xf32>
    %57 = tpu.matmul %54, %56, %cst_58 {dimension_numbers = #tpu.dot_dimension_numbers<[1], [0], [0], [1], [0, 0, 1, 1], [], []>} : vector<256x32xbf16>, vector<32x8xbf16>, vector<256x8xf32> -> vector<256x8xf32>
    %58 = arith.addf %51, %57 : vector<256x8xf32>
    %c1_59 = arith.constant 1 : index
    %c2_60 = arith.constant 2 : index
    %c0_61 = arith.constant 0 : index
    %59 = vector.load %arg8[%c1_59, %c2_60, %c0_61] : memref<18x18x32xf32, #tpu.memory_space<vmem>>, vector<16x16x32xf32>
    %60 = vector.shape_cast %59 : vector<16x16x32xf32> to vector<256x32xf32>
    %61 = arith.truncf %60 : vector<256x32xf32> to vector<256x32xbf16>
    %c1_62 = arith.constant 1 : index
    %c2_63 = arith.constant 2 : index
    %c0_64 = arith.constant 0 : index
    %c0_65 = arith.constant 0 : index
    %62 = vector.load %arg6[%c1_62, %c2_63, %c0_64, %c0_65] : memref<3x3x32x8xbf16, #tpu.memory_space<vmem>>, vector<1x1x32x8xbf16>
    %63 = vector.shape_cast %62 : vector<1x1x32x8xbf16> to vector<32x8xbf16>
    %cst_66 = arith.constant dense<0.000000e+00> : vector<256x8xf32>
    %64 = tpu.matmul %61, %63, %cst_66 {dimension_numbers = #tpu.dot_dimension_numbers<[1], [0], [0], [1], [0, 0, 1, 1], [], []>} : vector<256x32xbf16>, vector<32x8xbf16>, vector<256x8xf32> -> vector<256x8xf32>
    %65 = arith.addf %58, %64 : vector<256x8xf32>
    %c2_67 = arith.constant 2 : index
    %c0_68 = arith.constant 0 : index
    %c0_69 = arith.constant 0 : index
    %66 = vector.load %arg8[%c2_67, %c0_68, %c0_69] : memref<18x18x32xf32, #tpu.memory_space<vmem>>, vector<16x16x32xf32>
    %67 = vector.shape_cast %66 : vector<16x16x32xf32> to vector<256x32xf32>
    %68 = arith.truncf %67 : vector<256x32xf32> to vector<256x32xbf16>
    %c2_70 = arith.constant 2 : index
    %c0_71 = arith.constant 0 : index
    %c0_72 = arith.constant 0 : index
    %c0_73 = arith.constant 0 : index
    %69 = vector.load %arg6[%c2_70, %c0_71, %c0_72, %c0_73] : memref<3x3x32x8xbf16, #tpu.memory_space<vmem>>, vector<1x1x32x8xbf16>
    %70 = vector.shape_cast %69 : vector<1x1x32x8xbf16> to vector<32x8xbf16>
    %cst_74 = arith.constant dense<0.000000e+00> : vector<256x8xf32>
    %71 = tpu.matmul %68, %70, %cst_74 {dimension_numbers = #tpu.dot_dimension_numbers<[1], [0], [0], [1], [0, 0, 1, 1], [], []>} : vector<256x32xbf16>, vector<32x8xbf16>, vector<256x8xf32> -> vector<256x8xf32>
    %72 = arith.addf %65, %71 : vector<256x8xf32>
    %c2_75 = arith.constant 2 : index
    %c1_76 = arith.constant 1 : index
    %c0_77 = arith.constant 0 : index
    %73 = vector.load %arg8[%c2_75, %c1_76, %c0_77] : memref<18x18x32xf32, #tpu.memory_space<vmem>>, vector<16x16x32xf32>
    %74 = vector.shape_cast %73 : vector<16x16x32xf32> to vector<256x32xf32>
    %75 = arith.truncf %74 : vector<256x32xf32> to vector<256x32xbf16>
    %c2_78 = arith.constant 2 : index
    %c1_79 = arith.constant 1 : index
    %c0_80 = arith.constant 0 : index
    %c0_81 = arith.constant 0 : index
    %76 = vector.load %arg6[%c2_78, %c1_79, %c0_80, %c0_81] : memref<3x3x32x8xbf16, #tpu.memory_space<vmem>>, vector<1x1x32x8xbf16>
    %77 = vector.shape_cast %76 : vector<1x1x32x8xbf16> to vector<32x8xbf16>
    %cst_82 = arith.constant dense<0.000000e+00> : vector<256x8xf32>
    %78 = tpu.matmul %75, %77, %cst_82 {dimension_numbers = #tpu.dot_dimension_numbers<[1], [0], [0], [1], [0, 0, 1, 1], [], []>} : vector<256x32xbf16>, vector<32x8xbf16>, vector<256x8xf32> -> vector<256x8xf32>
    %79 = arith.addf %72, %78 : vector<256x8xf32>
    %c2_83 = arith.constant 2 : index
    %c2_84 = arith.constant 2 : index
    %c0_85 = arith.constant 0 : index
    %80 = vector.load %arg8[%c2_83, %c2_84, %c0_85] : memref<18x18x32xf32, #tpu.memory_space<vmem>>, vector<16x16x32xf32>
    %81 = vector.shape_cast %80 : vector<16x16x32xf32> to vector<256x32xf32>
    %82 = arith.truncf %81 : vector<256x32xf32> to vector<256x32xbf16>
    %c2_86 = arith.constant 2 : index
    %c2_87 = arith.constant 2 : index
    %c0_88 = arith.constant 0 : index
    %c0_89 = arith.constant 0 : index
    %83 = vector.load %arg6[%c2_86, %c2_87, %c0_88, %c0_89] : memref<3x3x32x8xbf16, #tpu.memory_space<vmem>>, vector<1x1x32x8xbf16>
    %84 = vector.shape_cast %83 : vector<1x1x32x8xbf16> to vector<32x8xbf16>
    %cst_90 = arith.constant dense<0.000000e+00> : vector<256x8xf32>
    %85 = tpu.matmul %82, %84, %cst_90 {dimension_numbers = #tpu.dot_dimension_numbers<[1], [0], [0], [1], [0, 0, 1, 1], [], []>} : vector<256x32xbf16>, vector<32x8xbf16>, vector<256x8xf32> -> vector<256x8xf32>
    %86 = arith.addf %79, %85 : vector<256x8xf32>
    %c0_91 = arith.constant 0 : index
    %c0_92 = arith.constant 0 : index
    %c0_93 = arith.constant 0 : index
    %c0_94 = arith.constant 0 : index
    %87 = vector.load %arg7[%c0_91, %c0_92, %c0_93, %c0_94] : memref<1x16x16x16xf32, #tpu.memory_space<vmem>>, vector<1x16x16x8xf32>
    %88 = vector.shape_cast %87 : vector<1x16x16x8xf32> to vector<16x16x8xf32>
    %89 = vector.shape_cast %1 : vector<16x16x8xf32> to vector<1x16x16x8xf32>
    tpu.vector_store %arg7[%c0_91, %c0_92, %c0_93, %c0_94], %89 {strides = array<i32>} : memref<1x16x16x16xf32, #tpu.memory_space<vmem>>, vector<1x16x16x8xf32>,
    %90 = vector.shape_cast %86 : vector<256x8xf32> to vector<16x16x8xf32>
    %c0_95 = arith.constant 0 : index
    %c0_96 = arith.constant 0 : index
    %c0_97 = arith.constant 0 : index
    %c8 = arith.constant 8 : index
    %91 = vector.load %arg7[%c0_95, %c0_96, %c0_97, %c8] : memref<1x16x16x16xf32, #tpu.memory_space<vmem>>, vector<1x16x16x8xf32>
    %92 = vector.shape_cast %91 : vector<1x16x16x8xf32> to vector<16x16x8xf32>
    %93 = vector.shape_cast %90 : vector<16x16x8xf32> to vector<1x16x16x8xf32>
    tpu.vector_store %arg7[%c0_95, %c0_96, %c0_97, %c8], %93 {strides = array<i32>} : memref<1x16x16x16xf32, #tpu.memory_space<vmem>>, vector<1x16x16x8xf32>,
    return
  }
  func.func @transform_0(%arg0: i32) -> (i32, i32, i32, i32) {
    %c0_i32 = arith.constant 0 : i32
    %c0_i32_0 = arith.constant 0 : i32
    %c0_i32_1 = arith.constant 0 : i32
    %c0_i32_2 = arith.constant 0 : i32
    return %arg0, %c0_i32, %c0_i32_0, %c0_i32_1 : i32, i32, i32, i32
  }
  func.func @transform_1(%arg0: i32) -> (i32, i32) {
    %c0_i32 = arith.constant 0 : i32
    %c0_i32_0 = arith.constant 0 : i32
    %c0_i32_1 = arith.constant 0 : i32
    return %c0_i32, %c0_i32_0 : i32, i32
  }
  func.func @transform_2(%arg0: i32) -> (i32, i32) {
    %c0_i32 = arith.constant 0 : i32
    %c0_i32_0 = arith.constant 0 : i32
    %c0_i32_1 = arith.constant 0 : i32
    return %c0_i32, %c0_i32_0 : i32, i32
  }
  func.func @transform_3(%arg0: i32) -> (i32, i32) {
    %c0_i32 = arith.constant 0 : i32
    %c0_i32_0 = arith.constant 0 : i32
    %c0_i32_1 = arith.constant 0 : i32
    return %c0_i32, %c0_i32_0 : i32, i32
  }
  func.func @transform_4(%arg0: i32) -> (i32, i32) {
    %c0_i32 = arith.constant 0 : i32
    %c0_i32_0 = arith.constant 0 : i32
    %c0_i32_1 = arith.constant 0 : i32
    return %c0_i32, %c0_i32_0 : i32, i32
  }
  func.func @transform_5(%arg0: i32) -> (i32, i32, i32, i32) {
    %c0_i32 = arith.constant 0 : i32
    %c0_i32_0 = arith.constant 0 : i32
    %c0_i32_1 = arith.constant 0 : i32
    %c0_i32_2 = arith.constant 0 : i32
    %c0_i32_3 = arith.constant 0 : i32
    return %c0_i32, %c0_i32_0, %c0_i32_1, %c0_i32_2 : i32, i32, i32, i32
  }
  func.func @transform_6(%arg0: i32) -> (i32, i32, i32, i32) {
    %c0_i32 = arith.constant 0 : i32
    %c0_i32_0 = arith.constant 0 : i32
    %c0_i32_1 = arith.constant 0 : i32
    %c0_i32_2 = arith.constant 0 : i32
    return %arg0, %c0_i32, %c0_i32_0, %c0_i32_1 : i32, i32, i32, i32
  }
}

</mosaic_0001>

<llo_original>
// kernel: tpu_custom_call.1
$region0: #{tpu_custom_call.1}
  #allocation0 [shape = 'u32[]', space=smem, size = 0x4, offset = 0x4, fixed_abs, tag = 'smem constant byte address 0x4 - core index']
  #allocation1 [shape = 'u32[72,128]{1,0:T(1,128)}', space=vmem, size = 0x9000, scoped, tag = 'internal scratch']
  #allocation2 [shape = 'f32[18,18,32]{2,1,0:T(8,128)}', space=vmem, size = 0x36000, scoped, tag = 'scratch operand']
  %s0 = inlined_call_operand.vmem [shape: f32[2,16,16,8], index: 0, kind: input, shape index: {}]
  %s1 = inlined_call_operand.vmem [shape: f32[1,8], index: 1, kind: input, shape index: {}]
  %s2 = inlined_call_operand.vmem [shape: f32[1,8], index: 2, kind: input, shape index: {}]
  %s3 = inlined_call_operand.vmem [shape: bf16[8,32], index: 3, kind: input, shape index: {}]
  %s4 = inlined_call_operand.vmem [shape: f32[1,32], index: 4, kind: input, shape index: {}]
  %s5 = inlined_call_operand.vmem [shape: bf16[3,3,32,8], index: 5, kind: input, shape index: {}]
  %s6 = inlined_call_operand.hbm [shape: f32[2,16,16,16], index: 6, kind: output, shape index: {}]
  %s7 = sld [smem:[#allocation0]]
  $region57: #{tpu_custom_call.1} parent=0
    _
  %s9 = ssub.s32 1, %s7
  %s10 = scalar_select 0, %s9, %s7
  $region1: #{tpu_custom_call.1} parent=0
    #allocation3 [shape = 'u8[262144]{0}', space=vmem, size = 0x40000, scoped, tag = 'output window, operand 0']
    #allocation4 [shape = 's32[2]{0}', space=sflag, size = 0x8, scoped, tag = 'scoped memory for tpu_custom_call.1']
    %11 = vsyncpa [#allocation4], 0
    %s12 = scalar_lea.sflag [#allocation4], 1
    %13 = vsyncpa %s12, 0
    loop: start=0, step=1, limit=4
    $region2: #{tpu_custom_call.1} parent=1 // loop_pre_header
      _
    $region3: #{tpu_custom_call.1} parent=1 // loop_header
      %s15 = sphi 0, %s19
      %p16 = scmp.ge.s32.totalorder %s15, 4
      %s25 = sphi 0, %s27
      %s28 = sphi 0, %s25
      %s29 = sphi 0, %s28
      %s45 = sphi 0, %s29
      %s49 = sphi 0, %s49
      %s51 = sphi 0, %s49
      %s52 = sphi 0, %s51
      %s66 = sphi 0, %s52
      %s70 = sphi 0, %s70
      %s72 = sphi 0, %s70
      %s73 = sphi 0, %s72
      %s87 = sphi 0, %s73
      %s91 = sphi 0, %s91
      %s93 = sphi 0, %s91
      %s94 = sphi 0, %s93
      %s108 = sphi 0, %s94
      %s112 = sphi 0, %s112
      %s114 = sphi 0, %s112
      %s115 = sphi 0, %s114
      %s129 = sphi 0, %s115
      %s133 = sphi 0, %s133
      %s135 = sphi 0, %s133
      %s136 = sphi 0, %s135
      %s150 = sphi 0, %s136
      %s156 = sphi 0, %s158
      %s159 = sphi 0, %s156
      %s160 = sphi 0, %s159
      %s176 = sphi 0, %s160
    $region4: #{tpu_custom_call.1} parent=1 // loop_header_branch
      %18 = sbr.rel (%p16) target = $region8
    $region5: #{tpu_custom_call.1} parent=1 // loop_body
      %s20 = ssub.s32 %s15, 1
      %s21 = ssub.s32 %s15, 2
      %s22 = sadd.s32 %s15, 1
      %s23 = ssub.s32 %s15, %s22
      %p24 = scmp.eq.s32.totalorder %s23, 0
      %s26 = sadd.s32 %s25, 1
      %s27 = scalar_select %p24, %s25, %s26
      %p30 = pneg %p24
      %p31 = scmp.eq.s32.totalorder %s15, 1
      %p32 = por %p30, %p31
      %p33 = scmp.ne.s32.totalorder %s25, %s28
      %p34 = scmp.eq.s32.totalorder %s15, 0
      %p35 = por %p33, %p34
      %p36 = scmp.ne.s32.totalorder %s25, %s28
      %p37 = scmp.eq.s32.totalorder %s20, 1
      %p38 = por %p36, %p37
      %p39 = scmp.ne.s32.totalorder %s28, %s29
      %p40 = scmp.eq.s32.totalorder %s20, 0
      %p41 = por %p39, %p40
      %p42 = scmp.ne.s32.totalorder %s28, %s29
      %p43 = scmp.eq.s32.totalorder %s21, 1
      %p44 = por %p42, %p43
      %p46 = scmp.ne.s32.totalorder %s29, %s45
      %p47 = scmp.eq.s32.totalorder %s21, 0
      %p48 = por %p46, %p47
      %s50 = sadd.s32 %s49, 1
      %p53 = scmp.eq.s32.totalorder %s15, 1
      %p54 = scmp.ne.s32.totalorder %s49, %s51
      %p55 = scmp.eq.s32.totalorder %s15, 0
      %p56 = por %p54, %p55
      %p57 = scmp.ne.s32.totalorder %s49, %s51
      %p58 = scmp.eq.s32.totalorder %s20, 1
      %p59 = por %p57, %p58
      %p60 = scmp.ne.s32.totalorder %s51, %s52
      %p61 = scmp.eq.s32.totalorder %s20, 0
      %p62 = por %p60, %p61
      %p63 = scmp.ne.s32.totalorder %s51, %s52
      %p64 = scmp.eq.s32.totalorder %s21, 1
      %p65 = por %p63, %p64
      %p67 = scmp.ne.s32.totalorder %s52, %s66
      %p68 = scmp.eq.s32.totalorder %s21, 0
      %p69 = por %p67, %p68
      %s71 = sadd.s32 %s70, 1
      %p74 = scmp.eq.s32.totalorder %s15, 1
      %p75 = scmp.ne.s32.totalorder %s70, %s72
      %p76 = scmp.eq.s32.totalorder %s15, 0
      %p77 = por %p75, %p76
      %p78 = scmp.ne.s32.totalorder %s70, %s72
      %p79 = scmp.eq.s32.totalorder %s20, 1
      %p80 = por %p78, %p79
      %p81 = scmp.ne.s32.totalorder %s72, %s73
      %p82 = scmp.eq.s32.totalorder %s20, 0
      %p83 = por %p81, %p82
      %p84 = scmp.ne.s32.totalorder %s72, %s73
      %p85 = scmp.eq.s32.totalorder %s21, 1
      %p86 = por %p84, %p85
      %p88 = scmp.ne.s32.totalorder %s73, %s87
      %p89 = scmp.eq.s32.totalorder %s21, 0
      %p90 = por %p88, %p89
      %s92 = sadd.s32 %s91, 1
      %p95 = scmp.eq.s32.totalorder %s15, 1
      %p96 = scmp.ne.s32.totalorder %s91, %s93
      %p97 = scmp.eq.s32.totalorder %s15, 0
      %p98 = por %p96, %p97
      %p99 = scmp.ne.s32.totalorder %s91, %s93
      %p100 = scmp.eq.s32.totalorder %s20, 1
      %p101 = por %p99, %p100
      %p102 = scmp.ne.s32.totalorder %s93, %s94
      %p103 = scmp.eq.s32.totalorder %s20, 0
      %p104 = por %p102, %p103
      %p105 = scmp.ne.s32.totalorder %s93, %s94
      %p106 = scmp.eq.s32.totalorder %s21, 1
      %p107 = por %p105, %p106
      %p109 = scmp.ne.s32.totalorder %s94, %s108
      %p110 = scmp.eq.s32.totalorder %s21, 0
      %p111 = por %p109, %p110
      %s113 = sadd.s32 %s112, 1
      %p116 = scmp.eq.s32.totalorder %s15, 1
      %p117 = scmp.ne.s32.totalorder %s112, %s114
      %p118 = scmp.eq.s32.totalorder %s15, 0
      %p119 = por %p117, %p118
      %p120 = scmp.ne.s32.totalorder %s112, %s114
      %p121 = scmp.eq.s32.totalorder %s20, 1
      %p122 = por %p120, %p121
      %p123 = scmp.ne.s32.totalorder %s114, %s115
      %p124 = scmp.eq.s32.totalorder %s20, 0
      %p125 = por %p123, %p124
      %p126 = scmp.ne.s32.totalorder %s114, %s115
      %p127 = scmp.eq.s32.totalorder %s21, 1
      %p128 = por %p126, %p127
      %p130 = scmp.ne.s32.totalorder %s115, %s129
      %p131 = scmp.eq.s32.totalorder %s21, 0
      %p132 = por %p130, %p131
      %s134 = sadd.s32 %s133, 1
      %p137 = scmp.eq.s32.totalorder %s15, 1
      %p138 = scmp.ne.s32.totalorder %s133, %s135
      %p139 = scmp.eq.s32.totalorder %s15, 0
      %p140 = por %p138, %p139
      %p141 = scmp.ne.s32.totalorder %s133, %s135
      %p142 = scmp.eq.s32.totalorder %s20, 1
      %p143 = por %p141, %p142
      %p144 = scmp.ne.s32.totalorder %s135, %s136
      %p145 = scmp.eq.s32.totalorder %s20, 0
      %p146 = por %p144, %p145
      %p147 = scmp.ne.s32.totalorder %s135, %s136
      %p148 = scmp.eq.s32.totalorder %s21, 1
      %p149 = por %p147, %p148
      %p151 = scmp.ne.s32.totalorder %s136, %s150
      %p152 = scmp.eq.s32.totalorder %s21, 0
      %p153 = por %p151, %p152
      %s154 = ssub.s32 %s15, %s22
      %p155 = scmp.eq.s32.totalorder %s154, 0
      %s157 = sadd.s32 %s156, 1
      %s158 = scalar_select %p155, %s156, %s157
      %p161 = pneg %p155
      %p162 = scmp.eq.s32.totalorder %s15, 1
      %p163 = por %p161, %p162
      %p164 = scmp.ne.s32.totalorder %s156, %s159
      %p165 = scmp.eq.s32.totalorder %s15, 0
      %p166 = por %p164, %p165
      %p167 = scmp.ne.s32.totalorder %s156, %s159
      %p168 = scmp.eq.s32.totalorder %s20, 1
      %p169 = por %p167, %p168
      %p170 = scmp.ne.s32.totalorder %s159, %s160
      %p171 = scmp.eq.s32.totalorder %s20, 0
      %p172 = por %p170, %p171
      %p173 = scmp.ne.s32.totalorder %s159, %s160
      %p174 = scmp.eq.s32.totalorder %s21, 1
      %p175 = por %p173, %p174
      %p177 = scmp.ne.s32.totalorder %s160, %s176
      %p178 = scmp.eq.s32.totalorder %s21, 0
      %p179 = por %p177, %p178
      %p180 = scmp.le.s32.totalorder 1, %s15
      %p181 = scmp.lt.s32.totalorder %s15, 3
      %p182 = pnand %p180, %p181
      %p183 = pneg %p182
      // Predicated region
      $region9: #{tpu_custom_call.1} parent=5 // pred_check
        _
      $region10: #{tpu_custom_call.1} parent=5 // pred_check_branch
        %185 = sbr.rel (%p182) target = $region12
      $region11: #{tpu_custom_call.1} parent=5 // pred_region
        %s186 = ssub.s32 %s15, 1
        // Predicated region
        $region13: #{tpu_custom_call.1} parent=11 // pred_check
          %p187 = pneg %p62
        $region14: #{tpu_custom_call.1} parent=11 // pred_check_branch
          %189 = sbr.rel (%p187) target = $region16
        $region15: #{tpu_custom_call.1} parent=11 // pred_region
          _
        $region16: #{tpu_custom_call.1} parent=11 // pred_fallthru
          _
        // Predicated region
        $region17: #{tpu_custom_call.1} parent=11 // pred_check
          %p190 = pneg %p83
        $region18: #{tpu_custom_call.1} parent=11 // pred_check_branch
          %192 = sbr.rel (%p190) target = $region20
        $region19: #{tpu_custom_call.1} parent=11 // pred_region
          _
        $region20: #{tpu_custom_call.1} parent=11 // pred_fallthru
          _
        // Predicated region
        $region21: #{tpu_custom_call.1} parent=11 // pred_check
          %p193 = pneg %p104
        $region22: #{tpu_custom_call.1} parent=11 // pred_check_branch
          %195 = sbr.rel (%p193) target = $region24
        $region23: #{tpu_custom_call.1} parent=11 // pred_region
          _
        $region24: #{tpu_custom_call.1} parent=11 // pred_fallthru
          _
        // Predicated region
        $region25: #{tpu_custom_call.1} parent=11 // pred_check
          %p196 = pneg %p125
        $region26: #{tpu_custom_call.1} parent=11 // pred_check_branch
          %198 = sbr.rel (%p196) target = $region28
        $region27: #{tpu_custom_call.1} parent=11 // pred_region
          _
        $region28: #{tpu_custom_call.1} parent=11 // pred_fallthru
          _
        // Predicated region
        $region29: #{tpu_custom_call.1} parent=11 // pred_check
          %p199 = pneg %p146
        $region30: #{tpu_custom_call.1} parent=11 // pred_check_branch
          %201 = sbr.rel (%p199) target = $region32
        $region31: #{tpu_custom_call.1} parent=11 // pred_region
          _
        $region32: #{tpu_custom_call.1} parent=11 // pred_fallthru
          _
      $region12: #{tpu_custom_call.1} parent=5 // pred_fallthru
        _
      %p202 = scmp.lt.s32.totalorder %s15, 2
      // Predicated region
      $region33: #{tpu_custom_call.1} parent=5 // pred_check
        %p203 = pneg %p202
      $region34: #{tpu_custom_call.1} parent=5 // pred_check_branch
        %205 = sbr.rel (%p203) target = $region36
      $region35: #{tpu_custom_call.1} parent=5 // pred_region
        // Predicated region
        $region37: #{tpu_custom_call.1} parent=35 // pred_check
          %p206 = pneg %p35
        $region38: #{tpu_custom_call.1} parent=35 // pred_check_branch
          %208 = sbr.rel (%p206) target = $region40
        $region39: #{tpu_custom_call.1} parent=35 // pred_region
          %p209 = scmp.lt.s32.totalorder %s15, 1
          %s210 = scalar_select %p209, %s15, 1
          %s211 = smul.addr %s210, 32
          %s212 = smul.addr %s211, 8
          %s213 = scalar_lea.vmem %s0, %s212
        $region40: #{tpu_custom_call.1} parent=35 // pred_fallthru
          _
      $region36: #{tpu_custom_call.1} parent=5 // pred_fallthru
        _
      %p214 = scmp.le.s32.totalorder 1, %s15
      %p215 = scmp.lt.s32.totalorder %s15, 3
      %p216 = pnand %p214, %p215
      %p217 = pneg %p216
      // Predicated region
      $region41: #{tpu_custom_call.1} parent=5 // pred_check
        _
      $region42: #{tpu_custom_call.1} parent=5 // pred_check_branch
        %219 = sbr.rel (%p216) target = $region44
      $region43: #{tpu_custom_call.1} parent=5 // pred_region
        %s220 = ssub.s32 %s15, 1
        %p221 = scmp.lt.s32.totalorder %s20, 1
        %s222 = scalar_select %p221, %s20, 1
        %s223 = smul.addr %s222, 32
        %s224 = smul.addr %s223, 8
        %s225 = scalar_lea.vmem %s0, %s224
        %p226 = pneg %p41
        %p227 = pneg %p38
        %p228 = pneg %p62
        %p229 = pneg %p59
        %p230 = pneg %p83
        %p231 = pneg %p80
        %p232 = pneg %p104
        %p233 = pneg %p101
        %p234 = pneg %p125
        %p235 = pneg %p122
        %p236 = pneg %p146
        %p237 = pneg %p143
        %p238 = pneg %p172
        %p239 = pneg %p169
        %s240 = sand.u32 %s159, 1
        %s241 = scalar_lea.sflag [#allocation4], %s240
        %s242 = sand.u32 %s159, 1
        %s243 = smul.addr %s242, 256
        %s244 = scalar_lea.vmem [#allocation3], %s243
        %p245 = scmp.lt.s32.totalorder %s20, 1
        %s246 = scalar_select %p245, %s20, 1
        %s247 = smul.addr %s246, 32
        %s248 = smul.addr %s247, 8
        %s249 = scalar_lea.vmem %s0, %s248
        %v251 = vld [vmem:[%s249] sm:$0xff]
        %v252 = vld [vmem:[%s249 + $0x8] sm:$0xff]
        %v253 = vld [vmem:[%s249 + $0x10] sm:$0xff]
        %v254 = vld [vmem:[%s249 + $0x18] sm:$0xff]
        %v255 = vld [vmem:[%s249 + $0x20] sm:$0xff]
        %v256 = vld [vmem:[%s249 + $0x28] sm:$0xff]
        %v257 = vld [vmem:[%s249 + $0x30] sm:$0xff]
        %v258 = vld [vmem:[%s249 + $0x38] sm:$0xff]
        %v259 = vld [vmem:[%s249 + $0x40] sm:$0xff]
        %v260 = vld [vmem:[%s249 + $0x48] sm:$0xff]
        %v261 = vld [vmem:[%s249 + $0x50] sm:$0xff]
        %v262 = vld [vmem:[%s249 + $0x58] sm:$0xff]
        %v263 = vld [vmem:[%s249 + $0x60] sm:$0xff]
        %v264 = vld [vmem:[%s249 + $0x68] sm:$0xff]
        %v265 = vld [vmem:[%s249 + $0x70] sm:$0xff]
        %v266 = vld [vmem:[%s249 + $0x78] sm:$0xff]
        %v267 = vld [vmem:[%s249 + $0x80] sm:$0xff]
        %v268 = vld [vmem:[%s249 + $0x88] sm:$0xff]
        %v269 = vld [vmem:[%s249 + $0x90] sm:$0xff]
        %v270 = vld [vmem:[%s249 + $0x98] sm:$0xff]
        %v271 = vld [vmem:[%s249 + $0xa0] sm:$0xff]
        %v272 = vld [vmem:[%s249 + $0xa8] sm:$0xff]
        %v273 = vld [vmem:[%s249 + $0xb0] sm:$0xff]
        %v274 = vld [vmem:[%s249 + $0xb8] sm:$0xff]
        %v275 = vld [vmem:[%s249 + $0xc0] sm:$0xff]
        %v276 = vld [vmem:[%s249 + $0xc8] sm:$0xff]
        %v277 = vld [vmem:[%s249 + $0xd0] sm:$0xff]
        %v278 = vld [vmem:[%s249 + $0xd8] sm:$0xff]
        %v279 = vld [vmem:[%s249 + $0xe0] sm:$0xff]
        %v280 = vld [vmem:[%s249 + $0xe8] sm:$0xff]
        %v281 = vld [vmem:[%s249 + $0xf0] sm:$0xff]
        %v282 = vld [vmem:[%s249 + $0xf8] sm:$0xff]
        %v283 = vld [vmem:[%s1] sm:$0x1]
        %v285 = vperm.slane %v283, 0
        %v287 = vmul.f32 %v251, %v285
        %v288 = vmul.f32 %v252, %v285
        %v289 = vmul.f32 %v253, %v285
        %v290 = vmul.f32 %v254, %v285
        %v291 = vmul.f32 %v255, %v285
        %v292 = vmul.f32 %v256, %v285
        %v293 = vmul.f32 %v257, %v285
        %v294 = vmul.f32 %v258, %v285
        %v295 = vmul.f32 %v259, %v285
        %v296 = vmul.f32 %v260, %v285
        %v297 = vmul.f32 %v261, %v285
        %v298 = vmul.f32 %v262, %v285
        %v299 = vmul.f32 %v263, %v285
        %v300 = vmul.f32 %v264, %v285
        %v301 = vmul.f32 %v265, %v285
        %v302 = vmul.f32 %v266, %v285
        %v303 = vmul.f32 %v267, %v285
        %v304 = vmul.f32 %v268, %v285
        %v305 = vmul.f32 %v269, %v285
        %v306 = vmul.f32 %v270, %v285
        %v307 = vmul.f32 %v271, %v285
        %v308 = vmul.f32 %v272, %v285
        %v309 = vmul.f32 %v273, %v285
        %v310 = vmul.f32 %v274, %v285
        %v311 = vmul.f32 %v275, %v285
        %v312 = vmul.f32 %v276, %v285
        %v313 = vmul.f32 %v277, %v285
        %v314 = vmul.f32 %v278, %v285
        %v315 = vmul.f32 %v279, %v285
        %v316 = vmul.f32 %v280, %v285
        %v317 = vmul.f32 %v281, %v285
        %v318 = vmul.f32 %v282, %v285
        %v319 = vld [vmem:[%s2] sm:$0x1]
        %v321 = vperm.slane %v319, 0
        %v323 = vadd.f32 %v287, %v321
        %v324 = vadd.f32 %v288, %v321
        %v325 = vadd.f32 %v289, %v321
        %v326 = vadd.f32 %v290, %v321
        %v327 = vadd.f32 %v291, %v321
        %v328 = vadd.f32 %v292, %v321
        %v329 = vadd.f32 %v293, %v321
        %v330 = vadd.f32 %v294, %v321
        %v331 = vadd.f32 %v295, %v321
        %v332 = vadd.f32 %v296, %v321
        %v333 = vadd.f32 %v297, %v321
        %v334 = vadd.f32 %v298, %v321
        %v335 = vadd.f32 %v299, %v321
        %v336 = vadd.f32 %v300, %v321
        %v337 = vadd.f32 %v301, %v321
        %v338 = vadd.f32 %v302, %v321
        %v339 = vadd.f32 %v303, %v321
        %v340 = vadd.f32 %v304, %v321
        %v341 = vadd.f32 %v305, %v321
        %v342 = vadd.f32 %v306, %v321
        %v343 = vadd.f32 %v307, %v321
        %v344 = vadd.f32 %v308, %v321
        %v345 = vadd.f32 %v309, %v321
        %v346 = vadd.f32 %v310, %v321
        %v347 = vadd.f32 %v311, %v321
        %v348 = vadd.f32 %v312, %v321
        %v349 = vadd.f32 %v313, %v321
        %v350 = vadd.f32 %v314, %v321
        %v351 = vadd.f32 %v315, %v321
        %v352 = vadd.f32 %v316, %v321
        %v353 = vadd.f32 %v317, %v321
        %v354 = vadd.f32 %v318, %v321
        %v355 = vmax.f32 %v323, 0.0
        %v356 = vmax.f32 %v324, 0.0
        %v357 = vmax.f32 %v325, 0.0
        %v358 = vmax.f32 %v326, 0.0
        %v359 = vmax.f32 %v327, 0.0
        %v360 = vmax.f32 %v328, 0.0
        %v361 = vmax.f32 %v329, 0.0
        %v362 = vmax.f32 %v330, 0.0
        %v363 = vmax.f32 %v331, 0.0
        %v364 = vmax.f32 %v332, 0.0
        %v365 = vmax.f32 %v333, 0.0
        %v366 = vmax.f32 %v334, 0.0
        %v367 = vmax.f32 %v335, 0.0
        %v368 = vmax.f32 %v336, 0.0
        %v369 = vmax.f32 %v337, 0.0
        %v370 = vmax.f32 %v338, 0.0
        %v371 = vmax.f32 %v339, 0.0
        %v372 = vmax.f32 %v340, 0.0
        %v373 = vmax.f32 %v341, 0.0
        %v374 = vmax.f32 %v342, 0.0
        %v375 = vmax.f32 %v343, 0.0
        %v376 = vmax.f32 %v344, 0.0
        %v377 = vmax.f32 %v345, 0.0
        %v378 = vmax.f32 %v346, 0.0
        %v379 = vmax.f32 %v347, 0.0
        %v380 = vmax.f32 %v348, 0.0
        %v381 = vmax.f32 %v349, 0.0
        %v382 = vmax.f32 %v350, 0.0
        %v383 = vmax.f32 %v351, 0.0
        %v384 = vmax.f32 %v352, 0.0
        %v385 = vmax.f32 %v353, 0.0
        %v386 = vmax.f32 %v354, 0.0
        %v387 = vpack.c.bf16 %v356, %v355
        %v388 = vpack.c.bf16 %v358, %v357
        %v389 = vpack.c.bf16 %v360, %v359
        %v390 = vpack.c.bf16 %v362, %v361
        %v391 = vpack.c.bf16 %v364, %v363
        %v392 = vpack.c.bf16 %v366, %v365
        %v393 = vpack.c.bf16 %v368, %v367
        %v394 = vpack.c.bf16 %v370, %v369
        %v395 = vpack.c.bf16 %v372, %v371
        %v396 = vpack.c.bf16 %v374, %v373
        %v397 = vpack.c.bf16 %v376, %v375
        %v398 = vpack.c.bf16 %v378, %v377
        %v399 = vpack.c.bf16 %v380, %v379
        %v400 = vpack.c.bf16 %v382, %v381
        %v401 = vpack.c.bf16 %v384, %v383
        %v402 = vpack.c.bf16 %v386, %v385
        %v403 = vld [vmem:[%s3] sm:$0xf]
        %v404 = vld [vmem:[%s4] sm:$0x1]
        %v406 = vperm.slane %v404, 0
        %vm408 = vcmask 64512
        %v410 = vsel %vm408, %v387, 0
        %v413 = vsel %vm408, %v388, 0
        %v416 = vsel %vm408, %v389, 0
        %v419 = vsel %vm408, %v390, 0
        %v422 = vsel %vm408, %v391, 0
        %v425 = vsel %vm408, %v392, 0
        %v428 = vsel %vm408, %v393, 0
        %v431 = vsel %vm408, %v394, 0
        %v434 = vsel %vm408, %v395, 0
        %v437 = vsel %vm408, %v396, 0
        %v440 = vsel %vm408, %v397, 0
        %v443 = vsel %vm408, %v398, 0
        %v446 = vsel %vm408, %v399, 0
        %v449 = vsel %vm408, %v400, 0
        %v452 = vsel %vm408, %v401, 0
        %v455 = vsel %vm408, %v402, 0
        %vm457 = vcmask 1043456
        %v459 = vsel %vm457, %v403, 0
        %461 = vmatpush.bf16.msra.mxu0 0
        %462 = vmatpush.bf16.msra.mxu0 0
        %463 = vmatpush.bf16.msra.mxu0 0
        %464 = vmatpush.bf16.msra.mxu0 0
        %465 = vmatpush.bf16.msra.mxu0 0
        %466 = vmatpush.bf16.msra.mxu0 0
        %467 = vmatpush.bf16.msra.mxu0 0
        %468 = vmatpush.bf16.msra.mxu0 %v459
        %469 = vmatmul.bf16.gmra.mxu0 %v410
        %v470 = vpop.f32.mrf.mxu0
        %v471 = vadd.f32 %v406, %v470
        %v472 = vpop.f32.mrf.mxu0
        %v473 = vadd.f32 %v406, %v472
        %474 = vmatmul.bf16.gmra.mxu0 %v413
        %v475 = vpop.f32.mrf.mxu0
        %v476 = vadd.f32 %v406, %v475
        %v477 = vpop.f32.mrf.mxu0
        %v478 = vadd.f32 %v406, %v477
        %479 = vmatmul.bf16.gmra.mxu0 %v416
        %v480 = vpop.f32.mrf.mxu0
        %v481 = vadd.f32 %v406, %v480
        %v482 = vpop.f32.mrf.mxu0
        %v483 = vadd.f32 %v406, %v482
        %484 = vmatmul.bf16.gmra.mxu0 %v419
        %v485 = vpop.f32.mrf.mxu0
        %v486 = vadd.f32 %v406, %v485
        %v487 = vpop.f32.mrf.mxu0
        %v488 = vadd.f32 %v406, %v487
        %489 = vmatmul.bf16.gmra.mxu0 %v422
        %v490 = vpop.f32.mrf.mxu0
        %v491 = vadd.f32 %v406, %v490
        %v492 = vpop.f32.mrf.mxu0
        %v493 = vadd.f32 %v406, %v492
        %494 = vmatmul.bf16.gmra.mxu0 %v425
        %v495 = vpop.f32.mrf.mxu0
        %v496 = vadd.f32 %v406, %v495
        %v497 = vpop.f32.mrf.mxu0
        %v498 = vadd.f32 %v406, %v497
        %499 = vmatmul.bf16.gmra.mxu0 %v428
        %v500 = vpop.f32.mrf.mxu0
        %v501 = vadd.f32 %v406, %v500
        %v502 = vpop.f32.mrf.mxu0
        %v503 = vadd.f32 %v406, %v502
        %504 = vmatmul.bf16.gmra.mxu0 %v431
        %v505 = vpop.f32.mrf.mxu0
        %v506 = vadd.f32 %v406, %v505
        %v507 = vpop.f32.mrf.mxu0
        %v508 = vadd.f32 %v406, %v507
        %509 = vmatmul.bf16.gmra.mxu0 %v434
        %v510 = vpop.f32.mrf.mxu0
        %v511 = vadd.f32 %v406, %v510
        %v512 = vpop.f32.mrf.mxu0
        %v513 = vadd.f32 %v406, %v512
        %514 = vmatmul.bf16.gmra.mxu0 %v437
        %v515 = vpop.f32.mrf.mxu0
        %v516 = vadd.f32 %v406, %v515
        %v517 = vpop.f32.mrf.mxu0
        %v518 = vadd.f32 %v406, %v517
        %519 = vmatmul.bf16.gmra.mxu0 %v440
        %v520 = vpop.f32.mrf.mxu0
        %v521 = vadd.f32 %v406, %v520
        %v522 = vpop.f32.mrf.mxu0
        %v523 = vadd.f32 %v406, %v522
        %524 = vmatmul.bf16.gmra.mxu0 %v443
        %v525 = vpop.f32.mrf.mxu0
        %v526 = vadd.f32 %v406, %v525
        %v527 = vpop.f32.mrf.mxu0
        %v528 = vadd.f32 %v406, %v527
        %529 = vmatmul.bf16.gmra.mxu0 %v446
        %v530 = vpop.f32.mrf.mxu0
        %v531 = vadd.f32 %v406, %v530
        %v532 = vpop.f32.mrf.mxu0
        %v533 = vadd.f32 %v406, %v532
        %534 = vmatmul.bf16.gmra.mxu0 %v449
        %v535 = vpop.f32.mrf.mxu0
        %v536 = vadd.f32 %v406, %v535
        %v537 = vpop.f32.mrf.mxu0
        %v538 = vadd.f32 %v406, %v537
        %539 = vmatmul.bf16.gmra.mxu0 %v452
        %v540 = vpop.f32.mrf.mxu0
        %v541 = vadd.f32 %v406, %v540
        %v542 = vpop.f32.mrf.mxu0
        %v543 = vadd.f32 %v406, %v542
        %544 = vmatmul.bf16.gmra.mxu0 %v455
        %v545 = vpop.f32.mrf.mxu0
        %v546 = vadd.f32 %v406, %v545
        %v547 = vpop.f32.mrf.mxu0
        %v548 = vadd.f32 %v406, %v547
        %549 = vdwg.mxu0
        %v550 = vmax.f32 %v471, 0.0
        %v551 = vmax.f32 %v473, 0.0
        %v552 = vmax.f32 %v476, 0.0
        %v553 = vmax.f32 %v478, 0.0
        %v554 = vmax.f32 %v481, 0.0
        %v555 = vmax.f32 %v483, 0.0
        %v556 = vmax.f32 %v486, 0.0
        %v557 = vmax.f32 %v488, 0.0
        %v558 = vmax.f32 %v491, 0.0
        %v559 = vmax.f32 %v493, 0.0
        %v560 = vmax.f32 %v496, 0.0
        %v561 = vmax.f32 %v498, 0.0
        %v562 = vmax.f32 %v501, 0.0
        %v563 = vmax.f32 %v503, 0.0
        %v564 = vmax.f32 %v506, 0.0
        %v565 = vmax.f32 %v508, 0.0
        %v566 = vmax.f32 %v511, 0.0
        %v567 = vmax.f32 %v513, 0.0
        %v568 = vmax.f32 %v516, 0.0
        %v569 = vmax.f32 %v518, 0.0
        %v570 = vmax.f32 %v521, 0.0
        %v571 = vmax.f32 %v523, 0.0
        %v572 = vmax.f32 %v526, 0.0
        %v573 = vmax.f32 %v528, 0.0
        %v574 = vmax.f32 %v531, 0.0
        %v575 = vmax.f32 %v533, 0.0
        %v576 = vmax.f32 %v536, 0.0
        %v577 = vmax.f32 %v538, 0.0
        %v578 = vmax.f32 %v541, 0.0
        %v579 = vmax.f32 %v543, 0.0
        %v580 = vmax.f32 %v546, 0.0
        %v581 = vmax.f32 %v548, 0.0
        %vm582 = vcmask 261120
        %583 = vst.msk [vmem:[#allocation2] sm:$0xff] %vm582, 0.0
        %584 = vst.msk [vmem:[#allocation2 + $0x8] sm:$0xff] %vm582, 0.0
        %vm585 = vcmask 254976
        %586 = vst.msk [vmem:[#allocation2 + $0x10] sm:$0x3] %vm585, 0.0
        %587 = vst.msk [vmem:[#allocation2 + $0x18] sm:$0xff] %vm582, 0.0
        %588 = vst.msk [vmem:[#allocation2 + $0x20] sm:$0xff] %vm582, 0.0
        %589 = vst.msk [vmem:[#allocation2 + $0x28] sm:$0x3] %vm585, 0.0
        %590 = vst.msk [vmem:[#allocation2 + $0x30] sm:$0xff] %vm582, 0.0
        %591 = vst.msk [vmem:[#allocation2 + $0x38] sm:$0xff] %vm582, 0.0
        %592 = vst.msk [vmem:[#allocation2 + $0x40] sm:$0x3] %vm585, 0.0
        %593 = vst.msk [vmem:[#allocation2 + $0x48] sm:$0xff] %vm582, 0.0
        %594 = vst.msk [vmem:[#allocation2 + $0x50] sm:$0xff] %vm582, 0.0
        %595 = vst.msk [vmem:[#allocation2 + $0x58] sm:$0x3] %vm585, 0.0
        %596 = vst.msk [vmem:[#allocation2 + $0x60] sm:$0xff] %vm582, 0.0
        %597 = vst.msk [vmem:[#allocation2 + $0x68] sm:$0xff] %vm582, 0.0
        %598 = vst.msk [vmem:[#allocation2 + $0x70] sm:$0x3] %vm585, 0.0
        %599 = vst.msk [vmem:[#allocation2 + $0x78] sm:$0xff] %vm582, 0.0
        %600 = vst.msk [vmem:[#allocation2 + $0x80] sm:$0xff] %vm582, 0.0
        %601 = vst.msk [vmem:[#allocation2 + $0x88] sm:$0x3] %vm585, 0.0
        %602 = vst.msk [vmem:[#allocation2 + $0x90] sm:$0xff] %vm582, 0.0
        %603 = vst.msk [vmem:[#allocation2 + $0x98] sm:$0xff] %vm582, 0.0
        %604 = vst.msk [vmem:[#allocation2 + $0xa0] sm:$0x3] %vm585, 0.0
        %605 = vst.msk [vmem:[#allocation2 + $0xa8] sm:$0xff] %vm582, 0.0
        %606 = vst.msk [vmem:[#allocation2 + $0xb0] sm:$0xff] %vm582, 0.0
        %607 = vst.msk [vmem:[#allocation2 + $0xb8] sm:$0x3] %vm585, 0.0
        %608 = vst.msk [vmem:[#allocation2 + $0xc0] sm:$0xff] %vm582, 0.0
        %609 = vst.msk [vmem:[#allocation2 + $0xc8] sm:$0xff] %vm582, 0.0
        %610 = vst.msk [vmem:[#allocation2 + $0xd0] sm:$0x3] %vm585, 0.0
        %611 = vst.msk [vmem:[#allocation2 + $0xd8] sm:$0xff] %vm582, 0.0
        %612 = vst.msk [vmem:[#allocation2 + $0xe0] sm:$0xff] %vm582, 0.0
        %613 = vst.msk [vmem:[#allocation2 + $0xe8] sm:$0x3] %vm585, 0.0
        %614 = vst.msk [vmem:[#allocation2 + $0xf0] sm:$0xff] %vm582, 0.0
        %615 = vst.msk [vmem:[#allocation2 + $0xf8] sm:$0xff] %vm582, 0.0
        %616 = vst.msk [vmem:[#allocation2 + $0x100] sm:$0x3] %vm585, 0.0
        %617 = vst.msk [vmem:[#allocation2 + $0x108] sm:$0xff] %vm582, 0.0
        %618 = vst.msk [vmem:[#allocation2 + $0x110] sm:$0xff] %vm582, 0.0
        %619 = vst.msk [vmem:[#allocation2 + $0x118] sm:$0x3] %vm585, 0.0
        %620 = vst.msk [vmem:[#allocation2 + $0x120] sm:$0xff] %vm582, 0.0
        %621 = vst.msk [vmem:[#allocation2 + $0x128] sm:$0xff] %vm582, 0.0
        %622 = vst.msk [vmem:[#allocation2 + $0x130] sm:$0x3] %vm585, 0.0
        %623 = vst.msk [vmem:[#allocation2 + $0x138] sm:$0xff] %vm582, 0.0
        %624 = vst.msk [vmem:[#allocation2 + $0x140] sm:$0xff] %vm582, 0.0
        %625 = vst.msk [vmem:[#allocation2 + $0x148] sm:$0x3] %vm585, 0.0
        %626 = vst.msk [vmem:[#allocation2 + $0x150] sm:$0xff] %vm582, 0.0
        %627 = vst.msk [vmem:[#allocation2 + $0x158] sm:$0xff] %vm582, 0.0
        %628 = vst.msk [vmem:[#allocation2 + $0x160] sm:$0x3] %vm585, 0.0
        %629 = vst.msk [vmem:[#allocation2 + $0x168] sm:$0xff] %vm582, 0.0
        %630 = vst.msk [vmem:[#allocation2 + $0x170] sm:$0xff] %vm582, 0.0
        %631 = vst.msk [vmem:[#allocation2 + $0x178] sm:$0x3] %vm585, 0.0
        %632 = vst.msk [vmem:[#allocation2 + $0x180] sm:$0xff] %vm582, 0.0
        %633 = vst.msk [vmem:[#allocation2 + $0x188] sm:$0xff] %vm582, 0.0
        %634 = vst.msk [vmem:[#allocation2 + $0x190] sm:$0x3] %vm585, 0.0
        %635 = vst.msk [vmem:[#allocation2 + $0x198] sm:$0xff] %vm582, 0.0
        %636 = vst.msk [vmem:[#allocation2 + $0x1a0] sm:$0xff] %vm582, 0.0
        %637 = vst.msk [vmem:[#allocation2 + $0x1a8] sm:$0x3] %vm585, 0.0
        %s638 = scalar_lea.vmem [#allocation2], 24
        %639 = vst.msk [vmem:[%s638 + $0x1] sm:$0xff] %vm582, %v550
        %640 = vst.msk [vmem:[%s638 + $0x9] sm:$0xff] %vm582, %v551
        %641 = vst.msk [vmem:[%s638 + $0x19] sm:$0xff] %vm582, %v552
        %642 = vst.msk [vmem:[%s638 + $0x21] sm:$0xff] %vm582, %v553
        %643 = vst.msk [vmem:[%s638 + $0x31] sm:$0xff] %vm582, %v554
        %644 = vst.msk [vmem:[%s638 + $0x39] sm:$0xff] %vm582, %v555
        %645 = vst.msk [vmem:[%s638 + $0x49] sm:$0xff] %vm582, %v556
        %646 = vst.msk [vmem:[%s638 + $0x51] sm:$0xff] %vm582, %v557
        %647 = vst.msk [vmem:[%s638 + $0x61] sm:$0xff] %vm582, %v558
        %648 = vst.msk [vmem:[%s638 + $0x69] sm:$0xff] %vm582, %v559
        %649 = vst.msk [vmem:[%s638 + $0x79] sm:$0xff] %vm582, %v560
        %650 = vst.msk [vmem:[%s638 + $0x81] sm:$0xff] %vm582, %v561
        %651 = vst.msk [vmem:[%s638 + $0x91] sm:$0xff] %vm582, %v562
        %652 = vst.msk [vmem:[%s638 + $0x99] sm:$0xff] %vm582, %v563
        %653 = vst.msk [vmem:[%s638 + $0xa9] sm:$0xff] %vm582, %v564
        %654 = vst.msk [vmem:[%s638 + $0xb1] sm:$0xff] %vm582, %v565
        %655 = vst.msk [vmem:[%s638 + $0xc1] sm:$0xff] %vm582, %v566
        %656 = vst.msk [vmem:[%s638 + $0xc9] sm:$0xff] %vm582, %v567
        %657 = vst.msk [vmem:[%s638 + $0xd9] sm:$0xff] %vm582, %v568
        %658 = vst.msk [vmem:[%s638 + $0xe1] sm:$0xff] %vm582, %v569
        %659 = vst.msk [vmem:[%s638 + $0xf1] sm:$0xff] %vm582, %v570
        %660 = vst.msk [vmem:[%s638 + $0xf9] sm:$0xff] %vm582, %v571
        %661 = vst.msk [vmem:[%s638 + $0x109] sm:$0xff] %vm582, %v572
        %662 = vst.msk [vmem:[%s638 + $0x111] sm:$0xff] %vm582, %v573
        %663 = vst.msk [vmem:[%s638 + $0x121] sm:$0xff] %vm582, %v574
        %664 = vst.msk [vmem:[%s638 + $0x129] sm:$0xff] %vm582, %v575
        %665 = vst.msk [vmem:[%s638 + $0x139] sm:$0xff] %vm582, %v576
        %666 = vst.msk [vmem:[%s638 + $0x141] sm:$0xff] %vm582, %v577
        %667 = vst.msk [vmem:[%s638 + $0x151] sm:$0xff] %vm582, %v578
        %668 = vst.msk [vmem:[%s638 + $0x159] sm:$0xff] %vm582, %v579
        %669 = vst.msk [vmem:[%s638 + $0x169] sm:$0xff] %vm582, %v580
        %670 = vst.msk [vmem:[%s638 + $0x171] sm:$0xff] %vm582, %v581
        %v671 = vld [vmem:[#allocation2] sm:$0xff]
        %v672 = vld [vmem:[#allocation2 + $0x8] sm:$0xff]
        %v673 = vld [vmem:[#allocation2 + $0x18] sm:$0xff]
        %v674 = vld [vmem:[#allocation2 + $0x20] sm:$0xff]
        %v675 = vld [vmem:[#allocation2 + $0x30] sm:$0xff]
        %v676 = vld [vmem:[#allocation2 + $0x38] sm:$0xff]
        %v677 = vld [vmem:[#allocation2 + $0x48] sm:$0xff]
        %v678 = vld [vmem:[#allocation2 + $0x50] sm:$0xff]
        %v679 = vld [vmem:[#allocation2 + $0x60] sm:$0xff]
        %v680 = vld [vmem:[#allocation2 + $0x68] sm:$0xff]
        %v681 = vld [vmem:[#allocation2 + $0x78] sm:$0xff]
        %v682 = vld [vmem:[#allocation2 + $0x80] sm:$0xff]
        %v683 = vld [vmem:[#allocation2 + $0x90] sm:$0xff]
        %v684 = vld [vmem:[#allocation2 + $0x98] sm:$0xff]
        %v685 = vld [vmem:[#allocation2 + $0xa8] sm:$0xff]
        %v686 = vld [vmem:[#allocation2 + $0xb0] sm:$0xff]
        %v687 = vld [vmem:[#allocation2 + $0xc0] sm:$0xff]
        %v688 = vld [vmem:[#allocation2 + $0xc8] sm:$0xff]
        %v689 = vld [vmem:[#allocation2 + $0xd8] sm:$0xff]
        %v690 = vld [vmem:[#allocation2 + $0xe0] sm:$0xff]
        %v691 = vld [vmem:[#allocation2 + $0xf0] sm:$0xff]
        %v692 = vld [vmem:[#allocation2 + $0xf8] sm:$0xff]
        %v693 = vld [vmem:[#allocation2 + $0x108] sm:$0xff]
        %v694 = vld [vmem:[#allocation2 + $0x110] sm:$0xff]
        %v695 = vld [vmem:[#allocation2 + $0x120] sm:$0xff]
        %v696 = vld [vmem:[#allocation2 + $0x128] sm:$0xff]
        %v697 = vld [vmem:[#allocation2 + $0x138] sm:$0xff]
        %v698 = vld [vmem:[#allocation2 + $0x140] sm:$0xff]
        %v699 = vld [vmem:[#allocation2 + $0x150] sm:$0xff]
        %v700 = vld [vmem:[#allocation2 + $0x158] sm:$0xff]
        %v701 = vld [vmem:[#allocation2 + $0x168] sm:$0xff]
        %v702 = vld [vmem:[#allocation2 + $0x170] sm:$0xff]
        %v703 = vpack.c.bf16 %v672, %v671
        %v704 = vpack.c.bf16 %v674, %v673
        %v705 = vpack.c.bf16 %v676, %v675
        %v706 = vpack.c.bf16 %v678, %v677
        %v707 = vpack.c.bf16 %v680, %v679
        %v708 = vpack.c.bf16 %v682, %v681
        %v709 = vpack.c.bf16 %v684, %v683
        %v710 = vpack.c.bf16 %v686, %v685
        %v711 = vpack.c.bf16 %v688, %v687
        %v712 = vpack.c.bf16 %v690, %v689
        %v713 = vpack.c.bf16 %v692, %v691
        %v714 = vpack.c.bf16 %v694, %v693
        %v715 = vpack.c.bf16 %v696, %v695
        %v716 = vpack.c.bf16 %v698, %v697
        %v717 = vpack.c.bf16 %v700, %v699
        %v718 = vpack.c.bf16 %v702, %v701
        %v719 = vld [vmem:[%s5] sm:$0xf]
        %v720 = vld [vmem:[%s5 + $0x4] sm:$0xf]
        %v721 = vld [vmem:[%s5 + $0x8] sm:$0xf]
        %v722 = vld [vmem:[%s5 + $0xc] sm:$0xf]
        %v723 = vld [vmem:[#allocation2 + $0x1] sm:$0xff]
        %v724 = vld [vmem:[#allocation2 + $0x9] sm:$0xff]
        %v725 = vld [vmem:[#allocation2 + $0x19] sm:$0xff]
        %v726 = vld [vmem:[#allocation2 + $0x21] sm:$0xff]
        %v727 = vld [vmem:[#allocation2 + $0x31] sm:$0xff]
        %v728 = vld [vmem:[#allocation2 + $0x39] sm:$0xff]
        %v729 = vld [vmem:[#allocation2 + $0x49] sm:$0xff]
        %v730 = vld [vmem:[#allocation2 + $0x51] sm:$0xff]
        %v731 = vld [vmem:[#allocation2 + $0x61] sm:$0xff]
        %v732 = vld [vmem:[#allocation2 + $0x69] sm:$0xff]
        %v733 = vld [vmem:[#allocation2 + $0x79] sm:$0xff]
        %v734 = vld [vmem:[#allocation2 + $0x81] sm:$0xff]
        %v735 = vld [vmem:[#allocation2 + $0x91] sm:$0xff]
        %v736 = vld [vmem:[#allocation2 + $0x99] sm:$0xff]
        %v737 = vld [vmem:[#allocation2 + $0xa9] sm:$0xff]
        %v738 = vld [vmem:[#allocation2 + $0xb1] sm:$0xff]
        %v739 = vld [vmem:[#allocation2 + $0xc1] sm:$0xff]
        %v740 = vld [vmem:[#allocation2 + $0xc9] sm:$0xff]
        %v741 = vld [vmem:[#allocation2 + $0xd9] sm:$0xff]
        %v742 = vld [vmem:[#allocation2 + $0xe1] sm:$0xff]
        %v743 = vld [vmem:[#allocation2 + $0xf1] sm:$0xff]
        %v744 = vld [vmem:[#allocation2 + $0xf9] sm:$0xff]
        %v745 = vld [vmem:[#allocation2 + $0x109] sm:$0xff]
        %v746 = vld [vmem:[#allocation2 + $0x111] sm:$0xff]
        %v747 = vld [vmem:[#allocation2 + $0x121] sm:$0xff]
        %v748 = vld [vmem:[#allocation2 + $0x129] sm:$0xff]
        %v749 = vld [vmem:[#allocation2 + $0x139] sm:$0xff]
        %v750 = vld [vmem:[#allocation2 + $0x141] sm:$0xff]
        %v751 = vld [vmem:[#allocation2 + $0x151] sm:$0xff]
        %v752 = vld [vmem:[#allocation2 + $0x159] sm:$0xff]
        %v753 = vld [vmem:[#allocation2 + $0x169] sm:$0xff]
        %v754 = vld [vmem:[#allocation2 + $0x171] sm:$0xff]
        %v755 = vpack.c.bf16 %v724, %v723
        %v756 = vpack.c.bf16 %v726, %v725
        %v757 = vpack.c.bf16 %v728, %v727
        %v758 = vpack.c.bf16 %v730, %v729
        %v759 = vpack.c.bf16 %v732, %v731
        %v760 = vpack.c.bf16 %v734, %v733
        %v761 = vpack.c.bf16 %v736, %v735
        %v762 = vpack.c.bf16 %v738, %v737
        %v763 = vpack.c.bf16 %v740, %v739
        %v764 = vpack.c.bf16 %v742, %v741
        %v765 = vpack.c.bf16 %v744, %v743
        %v766 = vpack.c.bf16 %v746, %v745
        %v767 = vpack.c.bf16 %v748, %v747
        %v768 = vpack.c.bf16 %v750, %v749
        %v769 = vpack.c.bf16 %v752, %v751
        %v770 = vpack.c.bf16 %v754, %v753
        %s771 = scalar_lea.vmem %s5, 16
        %v772 = vld [vmem:[%s771] sm:$0xf]
        %v773 = vld [vmem:[%s771 + $0x4] sm:$0xf]
        %v774 = vld [vmem:[%s771 + $0x8] sm:$0xf]
        %v775 = vld [vmem:[%s771 + $0xc] sm:$0xf]
        %v780 = vunpack.c.l.b16 %v772
        %v781 = vunpack.c.l.b16 %v773
        %v782 = vunpack.c.l.b16 %v774
        %v783 = vunpack.c.l.b16 %v775
        %v784 = vpack.c.b16 %v781, %v780
        %v785 = vpack.c.b16 %v783, %v782
        %v789 = vsel %vm582, %v755, 0
        %v792 = vsel %vm582, %v756, 0
        %v795 = vsel %vm582, %v757, 0
        %v798 = vsel %vm582, %v758, 0
        %v801 = vsel %vm582, %v759, 0
        %v804 = vsel %vm582, %v760, 0
        %v807 = vsel %vm582, %v761, 0
        %v810 = vsel %vm582, %v762, 0
        %v813 = vsel %vm582, %v763, 0
        %v816 = vsel %vm582, %v764, 0
        %v819 = vsel %vm582, %v765, 0
        %v822 = vsel %vm582, %v766, 0
        %v825 = vsel %vm582, %v767, 0
        %v828 = vsel %vm582, %v768, 0
        %v831 = vsel %vm582, %v769, 0
        %v834 = vsel %vm582, %v770, 0
        %836 = vmatpush.bf16.msra.mxu0 0
        %837 = vmatpush.bf16.msra.mxu0 0
        %838 = vmatpush.bf16.msra.mxu0 0
        %839 = vmatpush.bf16.msra.mxu0 0
        %840 = vmatpush.bf16.msra.mxu0 0
        %841 = vmatpush.bf16.msra.mxu0 0
        %842 = vmatpush.bf16.msra.mxu0 %v785
        %843 = vmatpush.bf16.msra.mxu0 %v784
        %844 = vmatmul.bf16.gmra.mxu0 %v789
        %v845 = vpop.f32.mrf.mxu0
        %v846 = vadd.f32 0.0, %v845
        %v847 = vpop.f32.mrf.mxu0
        %v848 = vadd.f32 0.0, %v847
        %849 = vmatmul.bf16.gmra.mxu0 %v792
        %v850 = vpop.f32.mrf.mxu0
        %v851 = vadd.f32 0.0, %v850
        %v852 = vpop.f32.mrf.mxu0
        %v853 = vadd.f32 0.0, %v852
        %854 = vmatmul.bf16.gmra.mxu0 %v795
        %v855 = vpop.f32.mrf.mxu0
        %v856 = vadd.f32 0.0, %v855
        %v857 = vpop.f32.mrf.mxu0
        %v858 = vadd.f32 0.0, %v857
        %859 = vmatmul.bf16.gmra.mxu0 %v798
        %v860 = vpop.f32.mrf.mxu0
        %v861 = vadd.f32 0.0, %v860
        %v862 = vpop.f32.mrf.mxu0
        %v863 = vadd.f32 0.0, %v862
        %864 = vmatmul.bf16.gmra.mxu0 %v801
        %v865 = vpop.f32.mrf.mxu0
        %v866 = vadd.f32 0.0, %v865
        %v867 = vpop.f32.mrf.mxu0
        %v868 = vadd.f32 0.0, %v867
        %869 = vmatmul.bf16.gmra.mxu0 %v804
        %v870 = vpop.f32.mrf.mxu0
        %v871 = vadd.f32 0.0, %v870
        %v872 = vpop.f32.mrf.mxu0
        %v873 = vadd.f32 0.0, %v872
        %874 = vmatmul.bf16.gmra.mxu0 %v807
        %v875 = vpop.f32.mrf.mxu0
        %v876 = vadd.f32 0.0, %v875
        %v877 = vpop.f32.mrf.mxu0
        %v878 = vadd.f32 0.0, %v877
        %879 = vmatmul.bf16.gmra.mxu0 %v810
        %v880 = vpop.f32.mrf.mxu0
        %v881 = vadd.f32 0.0, %v880
        %v882 = vpop.f32.mrf.mxu0
        %v883 = vadd.f32 0.0, %v882
        %884 = vmatmul.bf16.gmra.mxu0 %v813
        %v885 = vpop.f32.mrf.mxu0
        %v886 = vadd.f32 0.0, %v885
        %v887 = vpop.f32.mrf.mxu0
        %v888 = vadd.f32 0.0, %v887
        %889 = vmatmul.bf16.gmra.mxu0 %v816
        %v890 = vpop.f32.mrf.mxu0
        %v891 = vadd.f32 0.0, %v890
        %v892 = vpop.f32.mrf.mxu0
        %v893 = vadd.f32 0.0, %v892
        %894 = vmatmul.bf16.gmra.mxu0 %v819
        %v895 = vpop.f32.mrf.mxu0
        %v896 = vadd.f32 0.0, %v895
        %v897 = vpop.f32.mrf.mxu0
        %v898 = vadd.f32 0.0, %v897
        %899 = vmatmul.bf16.gmra.mxu0 %v822
        %v900 = vpop.f32.mrf.mxu0
        %v901 = vadd.f32 0.0, %v900
        %v902 = vpop.f32.mrf.mxu0
        %v903 = vadd.f32 0.0, %v902
        %904 = vmatmul.bf16.gmra.mxu0 %v825
        %v905 = vpop.f32.mrf.mxu0
        %v906 = vadd.f32 0.0, %v905
        %v907 = vpop.f32.mrf.mxu0
        %v908 = vadd.f32 0.0, %v907
        %909 = vmatmul.bf16.gmra.mxu0 %v828
        %v910 = vpop.f32.mrf.mxu0
        %v911 = vadd.f32 0.0, %v910
        %v912 = vpop.f32.mrf.mxu0
        %v913 = vadd.f32 0.0, %v912
        %914 = vmatmul.bf16.gmra.mxu0 %v831
        %v915 = vpop.f32.mrf.mxu0
        %v916 = vadd.f32 0.0, %v915
        %v917 = vpop.f32.mrf.mxu0
        %v918 = vadd.f32 0.0, %v917
        %919 = vmatmul.bf16.gmra.mxu0 %v834
        %v920 = vpop.f32.mrf.mxu0
        %v921 = vadd.f32 0.0, %v920
        %v922 = vpop.f32.mrf.mxu0
        %v923 = vadd.f32 0.0, %v922
        %924 = vdwg.mxu0
        %v929 = vunpack.c.l.b16 %v719
        %v930 = vunpack.c.l.b16 %v720
        %v931 = vunpack.c.l.b16 %v721
        %v932 = vunpack.c.l.b16 %v722
        %v933 = vpack.c.b16 %v930, %v929
        %v934 = vpack.c.b16 %v932, %v931
        %v938 = vsel %vm582, %v703, 0
        %v941 = vsel %vm582, %v704, 0
        %v944 = vsel %vm582, %v705, 0
        %v947 = vsel %vm582, %v706, 0
        %v950 = vsel %vm582, %v707, 0
        %v953 = vsel %vm582, %v708, 0
        %v956 = vsel %vm582, %v709, 0
        %v959 = vsel %vm582, %v710, 0
        %v962 = vsel %vm582, %v711, 0
        %v965 = vsel %vm582, %v712, 0
        %v968 = vsel %vm582, %v713, 0
        %v971 = vsel %vm582, %v714, 0
        %v974 = vsel %vm582, %v715, 0
        %v977 = vsel %vm582, %v716, 0
        %v980 = vsel %vm582, %v717, 0
        %v983 = vsel %vm582, %v718, 0
        %985 = vmatpush.bf16.msra.mxu0 0
        %986 = vmatpush.bf16.msra.mxu0 0
        %987 = vmatpush.bf16.msra.mxu0 0
        %988 = vmatpush.bf16.msra.mxu0 0
        %989 = vmatpush.bf16.msra.mxu0 0
        %990 = vmatpush.bf16.msra.mxu0 0
        %991 = vmatpush.bf16.msra.mxu0 %v934
        %992 = vmatpush.bf16.msra.mxu0 %v933
        %993 = vmatmul.bf16.gmra.mxu0 %v938
        %v994 = vpop.f32.mrf.mxu0
        %v995 = vadd.f32 %v846, %v994
        %v996 = vpop.f32.mrf.mxu0
        %v997 = vadd.f32 %v848, %v996
        %998 = vmatmul.bf16.gmra.mxu0 %v941
        %v999 = vpop.f32.mrf.mxu0
        %v1000 = vadd.f32 %v851, %v999
        %v1001 = vpop.f32.mrf.mxu0
        %v1002 = vadd.f32 %v853, %v1001
        %1003 = vmatmul.bf16.gmra.mxu0 %v944
        %v1004 = vpop.f32.mrf.mxu0
        %v1005 = vadd.f32 %v856, %v1004
        %v1006 = vpop.f32.mrf.mxu0
        %v1007 = vadd.f32 %v858, %v1006
        %1008 = vmatmul.bf16.gmra.mxu0 %v947
        %v1009 = vpop.f32.mrf.mxu0
        %v1010 = vadd.f32 %v861, %v1009
        %v1011 = vpop.f32.mrf.mxu0
        %v1012 = vadd.f32 %v863, %v1011
        %1013 = vmatmul.bf16.gmra.mxu0 %v950
        %v1014 = vpop.f32.mrf.mxu0
        %v1015 = vadd.f32 %v866, %v1014
        %v1016 = vpop.f32.mrf.mxu0
        %v1017 = vadd.f32 %v868, %v1016
        %1018 = vmatmul.bf16.gmra.mxu0 %v953
        %v1019 = vpop.f32.mrf.mxu0
        %v1020 = vadd.f32 %v871, %v1019
        %v1021 = vpop.f32.mrf.mxu0
        %v1022 = vadd.f32 %v873, %v1021
        %1023 = vmatmul.bf16.gmra.mxu0 %v956
        %v1024 = vpop.f32.mrf.mxu0
        %v1025 = vadd.f32 %v876, %v1024
        %v1026 = vpop.f32.mrf.mxu0
        %v1027 = vadd.f32 %v878, %v1026
        %1028 = vmatmul.bf16.gmra.mxu0 %v959
        %v1029 = vpop.f32.mrf.mxu0
        %v1030 = vadd.f32 %v881, %v1029
        %v1031 = vpop.f32.mrf.mxu0
        %v1032 = vadd.f32 %v883, %v1031
        %1033 = vmatmul.bf16.gmra.mxu0 %v962
        %v1034 = vpop.f32.mrf.mxu0
        %v1035 = vadd.f32 %v886, %v1034
        %v1036 = vpop.f32.mrf.mxu0
        %v1037 = vadd.f32 %v888, %v1036
        %1038 = vmatmul.bf16.gmra.mxu0 %v965
        %v1039 = vpop.f32.mrf.mxu0
        %v1040 = vadd.f32 %v891, %v1039
        %v1041 = vpop.f32.mrf.mxu0
        %v1042 = vadd.f32 %v893, %v1041
        %1043 = vmatmul.bf16.gmra.mxu0 %v968
        %v1044 = vpop.f32.mrf.mxu0
        %v1045 = vadd.f32 %v896, %v1044
        %v1046 = vpop.f32.mrf.mxu0
        %v1047 = vadd.f32 %v898, %v1046
        %1048 = vmatmul.bf16.gmra.mxu0 %v971
        %v1049 = vpop.f32.mrf.mxu0
        %v1050 = vadd.f32 %v901, %v1049
        %v1051 = vpop.f32.mrf.mxu0
        %v1052 = vadd.f32 %v903, %v1051
        %1053 = vmatmul.bf16.gmra.mxu0 %v974
        %v1054 = vpop.f32.mrf.mxu0
        %v1055 = vadd.f32 %v906, %v1054
        %v1056 = vpop.f32.mrf.mxu0
        %v1057 = vadd.f32 %v908, %v1056
        %1058 = vmatmul.bf16.gmra.mxu0 %v977
        %v1059 = vpop.f32.mrf.mxu0
        %v1060 = vadd.f32 %v911, %v1059
        %v1061 = vpop.f32.mrf.mxu0
        %v1062 = vadd.f32 %v913, %v1061
        %1063 = vmatmul.bf16.gmra.mxu0 %v980
        %v1064 = vpop.f32.mrf.mxu0
        %v1065 = vadd.f32 %v916, %v1064
        %v1066 = vpop.f32.mrf.mxu0
        %v1067 = vadd.f32 %v918, %v1066
        %1068 = vmatmul.bf16.gmra.mxu0 %v983
        %v1069 = vpop.f32.mrf.mxu0
        %v1070 = vadd.f32 %v921, %v1069
        %v1071 = vpop.f32.mrf.mxu0
        %v1072 = vadd.f32 %v923, %v1071
        %1073 = vdwg.mxu0
        %v1074 = vld [vmem:[#allocation2 + $0x2] sm:$0xff]
        %v1075 = vld [vmem:[#allocation2 + $0xa] sm:$0xff]
        %v1076 = vld [vmem:[#allocation2 + $0x1a] sm:$0xff]
        %v1077 = vld [vmem:[#allocation2 + $0x22] sm:$0xff]
        %v1078 = vld [vmem:[#allocation2 + $0x32] sm:$0xff]
        %v1079 = vld [vmem:[#allocation2 + $0x3a] sm:$0xff]
        %v1080 = vld [vmem:[#allocation2 + $0x4a] sm:$0xff]
        %v1081 = vld [vmem:[#allocation2 + $0x52] sm:$0xff]
        %v1082 = vld [vmem:[#allocation2 + $0x62] sm:$0xff]
        %v1083 = vld [vmem:[#allocation2 + $0x6a] sm:$0xff]
        %v1084 = vld [vmem:[#allocation2 + $0x7a] sm:$0xff]
        %v1085 = vld [vmem:[#allocation2 + $0x82] sm:$0xff]
        %v1086 = vld [vmem:[#allocation2 + $0x92] sm:$0xff]
        %v1087 = vld [vmem:[#allocation2 + $0x9a] sm:$0xff]
        %v1088 = vld [vmem:[#allocation2 + $0xaa] sm:$0xff]
        %v1089 = vld [vmem:[#allocation2 + $0xb2] sm:$0xff]
        %v1090 = vld [vmem:[#allocation2 + $0xc2] sm:$0xff]
        %v1091 = vld [vmem:[#allocation2 + $0xca] sm:$0xff]
        %v1092 = vld [vmem:[#allocation2 + $0xda] sm:$0xff]
        %v1093 = vld [vmem:[#allocation2 + $0xe2] sm:$0xff]
        %v1094 = vld [vmem:[#allocation2 + $0xf2] sm:$0xff]
        %v1095 = vld [vmem:[#allocation2 + $0xfa] sm:$0xff]
        %v1096 = vld [vmem:[#allocation2 + $0x10a] sm:$0xff]
        %v1097 = vld [vmem:[#allocation2 + $0x112] sm:$0xff]
        %v1098 = vld [vmem:[#allocation2 + $0x122] sm:$0xff]
        %v1099 = vld [vmem:[#allocation2 + $0x12a] sm:$0xff]
        %v1100 = vld [vmem:[#allocation2 + $0x13a] sm:$0xff]
        %v1101 = vld [vmem:[#allocation2 + $0x142] sm:$0xff]
        %v1102 = vld [vmem:[#allocation2 + $0x152] sm:$0xff]
        %v1103 = vld [vmem:[#allocation2 + $0x15a] sm:$0xff]
        %v1104 = vld [vmem:[#allocation2 + $0x16a] sm:$0xff]
        %v1105 = vld [vmem:[#allocation2 + $0x172] sm:$0xff]
        %v1106 = vpack.c.bf16 %v1075, %v1074
        %v1107 = vpack.c.bf16 %v1077, %v1076
        %v1108 = vpack.c.bf16 %v1079, %v1078
        %v1109 = vpack.c.bf16 %v1081, %v1080
        %v1110 = vpack.c.bf16 %v1083, %v1082
        %v1111 = vpack.c.bf16 %v1085, %v1084
        %v1112 = vpack.c.bf16 %v1087, %v1086
        %v1113 = vpack.c.bf16 %v1089, %v1088
        %v1114 = vpack.c.bf16 %v1091, %v1090
        %v1115 = vpack.c.bf16 %v1093, %v1092
        %v1116 = vpack.c.bf16 %v1095, %v1094
        %v1117 = vpack.c.bf16 %v1097, %v1096
        %v1118 = vpack.c.bf16 %v1099, %v1098
        %v1119 = vpack.c.bf16 %v1101, %v1100
        %v1120 = vpack.c.bf16 %v1103, %v1102
        %v1121 = vpack.c.bf16 %v1105, %v1104
        %s1122 = scalar_lea.vmem %s5, 32
        %v1123 = vld [vmem:[%s1122] sm:$0xf]
        %v1124 = vld [vmem:[%s1122 + $0x4] sm:$0xf]
        %v1125 = vld [vmem:[%s1122 + $0x8] sm:$0xf]
        %v1126 = vld [vmem:[%s1122 + $0xc] sm:$0xf]
        %v1131 = vunpack.c.l.b16 %v1123
        %v1132 = vunpack.c.l.b16 %v1124
        %v1133 = vunpack.c.l.b16 %v1125
        %v1134 = vunpack.c.l.b16 %v1126
        %v1135 = vpack.c.b16 %v1132, %v1131
        %v1136 = vpack.c.b16 %v1134, %v1133
        %v1140 = vsel %vm582, %v1106, 0
        %v1143 = vsel %vm582, %v1107, 0
        %v1146 = vsel %vm582, %v1108, 0
        %v1149 = vsel %vm582, %v1109, 0
        %v1152 = vsel %vm582, %v1110, 0
        %v1155 = vsel %vm582, %v1111, 0
        %v1158 = vsel %vm582, %v1112, 0
        %v1161 = vsel %vm582, %v1113, 0
        %v1164 = vsel %vm582, %v1114, 0
        %v1167 = vsel %vm582, %v1115, 0
        %v1170 = vsel %vm582, %v1116, 0
        %v1173 = vsel %vm582, %v1117, 0
        %v1176 = vsel %vm582, %v1118, 0
        %v1179 = vsel %vm582, %v1119, 0
        %v1182 = vsel %vm582, %v1120, 0
        %v1185 = vsel %vm582, %v1121, 0
        %1187 = vmatpush.bf16.msra.mxu0 0
        %1188 = vmatpush.bf16.msra.mxu0 0
        %1189 = vmatpush.bf16.msra.mxu0 0
        %1190 = vmatpush.bf16.msra.mxu0 0
        %1191 = vmatpush.bf16.msra.mxu0 0
        %1192 = vmatpush.bf16.msra.mxu0 0
        %1193 = vmatpush.bf16.msra.mxu0 %v1136
        %1194 = vmatpush.bf16.msra.mxu0 %v1135
        %1195 = vmatmul.bf16.gmra.mxu0 %v1140
        %v1196 = vpop.f32.mrf.mxu0
        %v1197 = vadd.f32 0.0, %v1196
        %v1198 = vpop.f32.mrf.mxu0
        %v1199 = vadd.f32 0.0, %v1198
        %1200 = vmatmul.bf16.gmra.mxu0 %v1143
        %v1201 = vpop.f32.mrf.mxu0
        %v1202 = vadd.f32 0.0, %v1201
        %v1203 = vpop.f32.mrf.mxu0
        %v1204 = vadd.f32 0.0, %v1203
        %1205 = vmatmul.bf16.gmra.mxu0 %v1146
        %v1206 = vpop.f32.mrf.mxu0
        %v1207 = vadd.f32 0.0, %v1206
        %v1208 = vpop.f32.mrf.mxu0
        %v1209 = vadd.f32 0.0, %v1208
        %1210 = vmatmul.bf16.gmra.mxu0 %v1149
        %v1211 = vpop.f32.mrf.mxu0
        %v1212 = vadd.f32 0.0, %v1211
        %v1213 = vpop.f32.mrf.mxu0
        %v1214 = vadd.f32 0.0, %v1213
        %1215 = vmatmul.bf16.gmra.mxu0 %v1152
        %v1216 = vpop.f32.mrf.mxu0
        %v1217 = vadd.f32 0.0, %v1216
        %v1218 = vpop.f32.mrf.mxu0
        %v1219 = vadd.f32 0.0, %v1218
        %1220 = vmatmul.bf16.gmra.mxu0 %v1155
        %v1221 = vpop.f32.mrf.mxu0
        %v1222 = vadd.f32 0.0, %v1221
        %v1223 = vpop.f32.mrf.mxu0
        %v1224 = vadd.f32 0.0, %v1223
        %1225 = vmatmul.bf16.gmra.mxu0 %v1158
        %v1226 = vpop.f32.mrf.mxu0
        %v1227 = vadd.f32 0.0, %v1226
        %v1228 = vpop.f32.mrf.mxu0
        %v1229 = vadd.f32 0.0, %v1228
        %1230 = vmatmul.bf16.gmra.mxu0 %v1161
        %v1231 = vpop.f32.mrf.mxu0
        %v1232 = vadd.f32 0.0, %v1231
        %v1233 = vpop.f32.mrf.mxu0
        %v1234 = vadd.f32 0.0, %v1233
        %1235 = vmatmul.bf16.gmra.mxu0 %v1164
        %v1236 = vpop.f32.mrf.mxu0
        %v1237 = vadd.f32 0.0, %v1236
        %v1238 = vpop.f32.mrf.mxu0
        %v1239 = vadd.f32 0.0, %v1238
        %1240 = vmatmul.bf16.gmra.mxu0 %v1167
        %v1241 = vpop.f32.mrf.mxu0
        %v1242 = vadd.f32 0.0, %v1241
        %v1243 = vpop.f32.mrf.mxu0
        %v1244 = vadd.f32 0.0, %v1243
        %1245 = vmatmul.bf16.gmra.mxu0 %v1170
        %v1246 = vpop.f32.mrf.mxu0
        %v1247 = vadd.f32 0.0, %v1246
        %v1248 = vpop.f32.mrf.mxu0
        %v1249 = vadd.f32 0.0, %v1248
        %1250 = vmatmul.bf16.gmra.mxu0 %v1173
        %v1251 = vpop.f32.mrf.mxu0
        %v1252 = vadd.f32 0.0, %v1251
        %v1253 = vpop.f32.mrf.mxu0
        %v1254 = vadd.f32 0.0, %v1253
        %1255 = vmatmul.bf16.gmra.mxu0 %v1176
        %v1256 = vpop.f32.mrf.mxu0
        %v1257 = vadd.f32 0.0, %v1256
        %v1258 = vpop.f32.mrf.mxu0
        %v1259 = vadd.f32 0.0, %v1258
        %1260 = vmatmul.bf16.gmra.mxu0 %v1179
        %v1261 = vpop.f32.mrf.mxu0
        %v1262 = vadd.f32 0.0, %v1261
        %v1263 = vpop.f32.mrf.mxu0
        %v1264 = vadd.f32 0.0, %v1263
        %1265 = vmatmul.bf16.gmra.mxu0 %v1182
        %v1266 = vpop.f32.mrf.mxu0
        %v1267 = vadd.f32 0.0, %v1266
        %v1268 = vpop.f32.mrf.mxu0
        %v1269 = vadd.f32 0.0, %v1268
        %1270 = vmatmul.bf16.gmra.mxu0 %v1185
        %v1271 = vpop.f32.mrf.mxu0
        %v1272 = vadd.f32 0.0, %v1271
        %v1273 = vpop.f32.mrf.mxu0
        %v1274 = vadd.f32 0.0, %v1273
        %1275 = vdwg.mxu0
        %v1276 = vadd.f32 %v995, %v1197
        %v1277 = vadd.f32 %v997, %v1199
        %v1278 = vadd.f32 %v1000, %v1202
        %v1279 = vadd.f32 %v1002, %v1204
        %v1280 = vadd.f32 %v1005, %v1207
        %v1281 = vadd.f32 %v1007, %v1209
        %v1282 = vadd.f32 %v1010, %v1212
        %v1283 = vadd.f32 %v1012, %v1214
        %v1284 = vadd.f32 %v1015, %v1217
        %v1285 = vadd.f32 %v1017, %v1219
        %v1286 = vadd.f32 %v1020, %v1222
        %v1287 = vadd.f32 %v1022, %v1224
        %v1288 = vadd.f32 %v1025, %v1227
        %v1289 = vadd.f32 %v1027, %v1229
        %v1290 = vadd.f32 %v1030, %v1232
        %v1291 = vadd.f32 %v1032, %v1234
        %v1292 = vadd.f32 %v1035, %v1237
        %v1293 = vadd.f32 %v1037, %v1239
        %v1294 = vadd.f32 %v1040, %v1242
        %v1295 = vadd.f32 %v1042, %v1244
        %v1296 = vadd.f32 %v1045, %v1247
        %v1297 = vadd.f32 %v1047, %v1249
        %v1298 = vadd.f32 %v1050, %v1252
        %v1299 = vadd.f32 %v1052, %v1254
        %v1300 = vadd.f32 %v1055, %v1257
        %v1301 = vadd.f32 %v1057, %v1259
        %v1302 = vadd.f32 %v1060, %v1262
        %v1303 = vadd.f32 %v1062, %v1264
        %v1304 = vadd.f32 %v1065, %v1267
        %v1305 = vadd.f32 %v1067, %v1269
        %v1306 = vadd.f32 %v1070, %v1272
        %v1307 = vadd.f32 %v1072, %v1274
        %v1308 = vld [vmem:[%s638] sm:$0xff]
        %v1309 = vld [vmem:[%s638 + $0x8] sm:$0xff]
        %v1310 = vld [vmem:[%s638 + $0x18] sm:$0xff]
        %v1311 = vld [vmem:[%s638 + $0x20] sm:$0xff]
        %v1312 = vld [vmem:[%s638 + $0x30] sm:$0xff]
        %v1313 = vld [vmem:[%s638 + $0x38] sm:$0xff]
        %v1314 = vld [vmem:[%s638 + $0x48] sm:$0xff]
        %v1315 = vld [vmem:[%s638 + $0x50] sm:$0xff]
        %v1316 = vld [vmem:[%s638 + $0x60] sm:$0xff]
        %v1317 = vld [vmem:[%s638 + $0x68] sm:$0xff]
        %v1318 = vld [vmem:[%s638 + $0x78] sm:$0xff]
        %v1319 = vld [vmem:[%s638 + $0x80] sm:$0xff]
        %v1320 = vld [vmem:[%s638 + $0x90] sm:$0xff]
        %v1321 = vld [vmem:[%s638 + $0x98] sm:$0xff]
        %v1322 = vld [vmem:[%s638 + $0xa8] sm:$0xff]
        %v1323 = vld [vmem:[%s638 + $0xb0] sm:$0xff]
        %v1324 = vld [vmem:[%s638 + $0xc0] sm:$0xff]
        %v1325 = vld [vmem:[%s638 + $0xc8] sm:$0xff]
        %v1326 = vld [vmem:[%s638 + $0xd8] sm:$0xff]
        %v1327 = vld [vmem:[%s638 + $0xe0] sm:$0xff]
        %v1328 = vld [vmem:[%s638 + $0xf0] sm:$0xff]
        %v1329 = vld [vmem:[%s638 + $0xf8] sm:$0xff]
        %v1330 = vld [vmem:[%s638 + $0x108] sm:$0xff]
        %v1331 = vld [vmem:[%s638 + $0x110] sm:$0xff]
        %v1332 = vld [vmem:[%s638 + $0x120] sm:$0xff]
        %v1333 = vld [vmem:[%s638 + $0x128] sm:$0xff]
        %v1334 = vld [vmem:[%s638 + $0x138] sm:$0xff]
        %v1335 = vld [vmem:[%s638 + $0x140] sm:$0xff]
        %v1336 = vld [vmem:[%s638 + $0x150] sm:$0xff]
        %v1337 = vld [vmem:[%s638 + $0x158] sm:$0xff]
        %v1338 = vld [vmem:[%s638 + $0x168] sm:$0xff]
        %v1339 = vld [vmem:[%s638 + $0x170] sm:$0xff]
        %v1340 = vpack.c.bf16 %v1309, %v1308
        %v1341 = vpack.c.bf16 %v1311, %v1310
        %v1342 = vpack.c.bf16 %v1313, %v1312
        %v1343 = vpack.c.bf16 %v1315, %v1314
        %v1344 = vpack.c.bf16 %v1317, %v1316
        %v1345 = vpack.c.bf16 %v1319, %v1318
        %v1346 = vpack.c.bf16 %v1321, %v1320
        %v1347 = vpack.c.bf16 %v1323, %v1322
        %v1348 = vpack.c.bf16 %v1325, %v1324
        %v1349 = vpack.c.bf16 %v1327, %v1326
        %v1350 = vpack.c.bf16 %v1329, %v1328
        %v1351 = vpack.c.bf16 %v1331, %v1330
        %v1352 = vpack.c.bf16 %v1333, %v1332
        %v1353 = vpack.c.bf16 %v1335, %v1334
        %v1354 = vpack.c.bf16 %v1337, %v1336
        %v1355 = vpack.c.bf16 %v1339, %v1338
        %s1356 = scalar_lea.vmem %s5, 48
        %v1357 = vld [vmem:[%s1356] sm:$0xf]
        %v1358 = vld [vmem:[%s1356 + $0x4] sm:$0xf]
        %v1359 = vld [vmem:[%s1356 + $0x8] sm:$0xf]
        %v1360 = vld [vmem:[%s1356 + $0xc] sm:$0xf]
        %v1365 = vunpack.c.l.b16 %v1357
        %v1366 = vunpack.c.l.b16 %v1358
        %v1367 = vunpack.c.l.b16 %v1359
        %v1368 = vunpack.c.l.b16 %v1360
        %v1369 = vpack.c.b16 %v1366, %v1365
        %v1370 = vpack.c.b16 %v1368, %v1367
        %v1374 = vsel %vm582, %v1340, 0
        %v1377 = vsel %vm582, %v1341, 0
        %v1380 = vsel %vm582, %v1342, 0
        %v1383 = vsel %vm582, %v1343, 0
        %v1386 = vsel %vm582, %v1344, 0
        %v1389 = vsel %vm582, %v1345, 0
        %v1392 = vsel %vm582, %v1346, 0
        %v1395 = vsel %vm582, %v1347, 0
        %v1398 = vsel %vm582, %v1348, 0
        %v1401 = vsel %vm582, %v1349, 0
        %v1404 = vsel %vm582, %v1350, 0
        %v1407 = vsel %vm582, %v1351, 0
        %v1410 = vsel %vm582, %v1352, 0
        %v1413 = vsel %vm582, %v1353, 0
        %v1416 = vsel %vm582, %v1354, 0
        %v1419 = vsel %vm582, %v1355, 0
        %1421 = vmatpush.bf16.msra.mxu0 0
        %1422 = vmatpush.bf16.msra.mxu0 0
        %1423 = vmatpush.bf16.msra.mxu0 0
        %1424 = vmatpush.bf16.msra.mxu0 0
        %1425 = vmatpush.bf16.msra.mxu0 0
        %1426 = vmatpush.bf16.msra.mxu0 0
        %1427 = vmatpush.bf16.msra.mxu0 %v1370
        %1428 = vmatpush.bf16.msra.mxu0 %v1369
        %1429 = vmatmul.bf16.gmra.mxu0 %v1374
        %v1430 = vpop.f32.mrf.mxu0
        %v1431 = vadd.f32 0.0, %v1430
        %v1432 = vpop.f32.mrf.mxu0
        %v1433 = vadd.f32 0.0, %v1432
        %1434 = vmatmul.bf16.gmra.mxu0 %v1377
        %v1435 = vpop.f32.mrf.mxu0
        %v1436 = vadd.f32 0.0, %v1435
        %v1437 = vpop.f32.mrf.mxu0
        %v1438 = vadd.f32 0.0, %v1437
        %1439 = vmatmul.bf16.gmra.mxu0 %v1380
        %v1440 = vpop.f32.mrf.mxu0
        %v1441 = vadd.f32 0.0, %v1440
        %v1442 = vpop.f32.mrf.mxu0
        %v1443 = vadd.f32 0.0, %v1442
        %1444 = vmatmul.bf16.gmra.mxu0 %v1383
        %v1445 = vpop.f32.mrf.mxu0
        %v1446 = vadd.f32 0.0, %v1445
        %v1447 = vpop.f32.mrf.mxu0
        %v1448 = vadd.f32 0.0, %v1447
        %1449 = vmatmul.bf16.gmra.mxu0 %v1386
        %v1450 = vpop.f32.mrf.mxu0
        %v1451 = vadd.f32 0.0, %v1450
        %v1452 = vpop.f32.mrf.mxu0
        %v1453 = vadd.f32 0.0, %v1452
        %1454 = vmatmul.bf16.gmra.mxu0 %v1389
        %v1455 = vpop.f32.mrf.mxu0
        %v1456 = vadd.f32 0.0, %v1455
        %v1457 = vpop.f32.mrf.mxu0
        %v1458 = vadd.f32 0.0, %v1457
        %1459 = vmatmul.bf16.gmra.mxu0 %v1392
        %v1460 = vpop.f32.mrf.mxu0
        %v1461 = vadd.f32 0.0, %v1460
        %v1462 = vpop.f32.mrf.mxu0
        %v1463 = vadd.f32 0.0, %v1462
        %1464 = vmatmul.bf16.gmra.mxu0 %v1395
        %v1465 = vpop.f32.mrf.mxu0
        %v1466 = vadd.f32 0.0, %v1465
        %v1467 = vpop.f32.mrf.mxu0
        %v1468 = vadd.f32 0.0, %v1467
        %1469 = vmatmul.bf16.gmra.mxu0 %v1398
        %v1470 = vpop.f32.mrf.mxu0
        %v1471 = vadd.f32 0.0, %v1470
        %v1472 = vpop.f32.mrf.mxu0
        %v1473 = vadd.f32 0.0, %v1472
        %1474 = vmatmul.bf16.gmra.mxu0 %v1401
        %v1475 = vpop.f32.mrf.mxu0
        %v1476 = vadd.f32 0.0, %v1475
        %v1477 = vpop.f32.mrf.mxu0
        %v1478 = vadd.f32 0.0, %v1477
        %1479 = vmatmul.bf16.gmra.mxu0 %v1404
        %v1480 = vpop.f32.mrf.mxu0
        %v1481 = vadd.f32 0.0, %v1480
        %v1482 = vpop.f32.mrf.mxu0
        %v1483 = vadd.f32 0.0, %v1482
        %1484 = vmatmul.bf16.gmra.mxu0 %v1407
        %v1485 = vpop.f32.mrf.mxu0
        %v1486 = vadd.f32 0.0, %v1485
        %v1487 = vpop.f32.mrf.mxu0
        %v1488 = vadd.f32 0.0, %v1487
        %1489 = vmatmul.bf16.gmra.mxu0 %v1410
        %v1490 = vpop.f32.mrf.mxu0
        %v1491 = vadd.f32 0.0, %v1490
        %v1492 = vpop.f32.mrf.mxu0
        %v1493 = vadd.f32 0.0, %v1492
        %1494 = vmatmul.bf16.gmra.mxu0 %v1413
        %v1495 = vpop.f32.mrf.mxu0
        %v1496 = vadd.f32 0.0, %v1495
        %v1497 = vpop.f32.mrf.mxu0
        %v1498 = vadd.f32 0.0, %v1497
        %1499 = vmatmul.bf16.gmra.mxu0 %v1416
        %v1500 = vpop.f32.mrf.mxu0
        %v1501 = vadd.f32 0.0, %v1500
        %v1502 = vpop.f32.mrf.mxu0
        %v1503 = vadd.f32 0.0, %v1502
        %1504 = vmatmul.bf16.gmra.mxu0 %v1419
        %v1505 = vpop.f32.mrf.mxu0
        %v1506 = vadd.f32 0.0, %v1505
        %v1507 = vpop.f32.mrf.mxu0
        %v1508 = vadd.f32 0.0, %v1507
        %1509 = vdwg.mxu0
        %v1510 = vadd.f32 %v1276, %v1431
        %v1511 = vadd.f32 %v1277, %v1433
        %v1512 = vadd.f32 %v1278, %v1436
        %v1513 = vadd.f32 %v1279, %v1438
        %v1514 = vadd.f32 %v1280, %v1441
        %v1515 = vadd.f32 %v1281, %v1443
        %v1516 = vadd.f32 %v1282, %v1446
        %v1517 = vadd.f32 %v1283, %v1448
        %v1518 = vadd.f32 %v1284, %v1451
        %v1519 = vadd.f32 %v1285, %v1453
        %v1520 = vadd.f32 %v1286, %v1456
        %v1521 = vadd.f32 %v1287, %v1458
        %v1522 = vadd.f32 %v1288, %v1461
        %v1523 = vadd.f32 %v1289, %v1463
        %v1524 = vadd.f32 %v1290, %v1466
        %v1525 = vadd.f32 %v1291, %v1468
        %v1526 = vadd.f32 %v1292, %v1471
        %v1527 = vadd.f32 %v1293, %v1473
        %v1528 = vadd.f32 %v1294, %v1476
        %v1529 = vadd.f32 %v1295, %v1478
        %v1530 = vadd.f32 %v1296, %v1481
        %v1531 = vadd.f32 %v1297, %v1483
        %v1532 = vadd.f32 %v1298, %v1486
        %v1533 = vadd.f32 %v1299, %v1488
        %v1534 = vadd.f32 %v1300, %v1491
        %v1535 = vadd.f32 %v1301, %v1493
        %v1536 = vadd.f32 %v1302, %v1496
        %v1537 = vadd.f32 %v1303, %v1498
        %v1538 = vadd.f32 %v1304, %v1501
        %v1539 = vadd.f32 %v1305, %v1503
        %v1540 = vadd.f32 %v1306, %v1506
        %v1541 = vadd.f32 %v1307, %v1508
        %v1542 = vld [vmem:[%s638 + $0x1] sm:$0xff]
        %v1543 = vld [vmem:[%s638 + $0x9] sm:$0xff]
        %v1544 = vld [vmem:[%s638 + $0x19] sm:$0xff]
        %v1545 = vld [vmem:[%s638 + $0x21] sm:$0xff]
        %v1546 = vld [vmem:[%s638 + $0x31] sm:$0xff]
        %v1547 = vld [vmem:[%s638 + $0x39] sm:$0xff]
        %v1548 = vld [vmem:[%s638 + $0x49] sm:$0xff]
        %v1549 = vld [vmem:[%s638 + $0x51] sm:$0xff]
        %v1550 = vld [vmem:[%s638 + $0x61] sm:$0xff]
        %v1551 = vld [vmem:[%s638 + $0x69] sm:$0xff]
        %v1552 = vld [vmem:[%s638 + $0x79] sm:$0xff]
        %v1553 = vld [vmem:[%s638 + $0x81] sm:$0xff]
        %v1554 = vld [vmem:[%s638 + $0x91] sm:$0xff]
        %v1555 = vld [vmem:[%s638 + $0x99] sm:$0xff]
        %v1556 = vld [vmem:[%s638 + $0xa9] sm:$0xff]
        %v1557 = vld [vmem:[%s638 + $0xb1] sm:$0xff]
        %v1558 = vld [vmem:[%s638 + $0xc1] sm:$0xff]
        %v1559 = vld [vmem:[%s638 + $0xc9] sm:$0xff]
        %v1560 = vld [vmem:[%s638 + $0xd9] sm:$0xff]
        %v1561 = vld [vmem:[%s638 + $0xe1] sm:$0xff]
        %v1562 = vld [vmem:[%s638 + $0xf1] sm:$0xff]
        %v1563 = vld [vmem:[%s638 + $0xf9] sm:$0xff]
        %v1564 = vld [vmem:[%s638 + $0x109] sm:$0xff]
        %v1565 = vld [vmem:[%s638 + $0x111] sm:$0xff]
        %v1566 = vld [vmem:[%s638 + $0x121] sm:$0xff]
        %v1567 = vld [vmem:[%s638 + $0x129] sm:$0xff]
        %v1568 = vld [vmem:[%s638 + $0x139] sm:$0xff]
        %v1569 = vld [vmem:[%s638 + $0x141] sm:$0xff]
        %v1570 = vld [vmem:[%s638 + $0x151] sm:$0xff]
        %v1571 = vld [vmem:[%s638 + $0x159] sm:$0xff]
        %v1572 = vld [vmem:[%s638 + $0x169] sm:$0xff]
        %v1573 = vld [vmem:[%s638 + $0x171] sm:$0xff]
        %v1574 = vpack.c.bf16 %v1543, %v1542
        %v1575 = vpack.c.bf16 %v1545, %v1544
        %v1576 = vpack.c.bf16 %v1547, %v1546
        %v1577 = vpack.c.bf16 %v1549, %v1548
        %v1578 = vpack.c.bf16 %v1551, %v1550
        %v1579 = vpack.c.bf16 %v1553, %v1552
        %v1580 = vpack.c.bf16 %v1555, %v1554
        %v1581 = vpack.c.bf16 %v1557, %v1556
        %v1582 = vpack.c.bf16 %v1559, %v1558
        %v1583 = vpack.c.bf16 %v1561, %v1560
        %v1584 = vpack.c.bf16 %v1563, %v1562
        %v1585 = vpack.c.bf16 %v1565, %v1564
        %v1586 = vpack.c.bf16 %v1567, %v1566
        %v1587 = vpack.c.bf16 %v1569, %v1568
        %v1588 = vpack.c.bf16 %v1571, %v1570
        %v1589 = vpack.c.bf16 %v1573, %v1572
        %s1590 = scalar_lea.vmem %s5, 64
        %v1591 = vld [vmem:[%s1590] sm:$0xf]
        %v1592 = vld [vmem:[%s1590 + $0x4] sm:$0xf]
        %v1593 = vld [vmem:[%s1590 + $0x8] sm:$0xf]
        %v1594 = vld [vmem:[%s1590 + $0xc] sm:$0xf]
        %v1599 = vunpack.c.l.b16 %v1591
        %v1600 = vunpack.c.l.b16 %v1592
        %v1601 = vunpack.c.l.b16 %v1593
        %v1602 = vunpack.c.l.b16 %v1594
        %v1603 = vpack.c.b16 %v1600, %v1599
        %v1604 = vpack.c.b16 %v1602, %v1601
        %v1608 = vsel %vm582, %v1574, 0
        %v1611 = vsel %vm582, %v1575, 0
        %v1614 = vsel %vm582, %v1576, 0
        %v1617 = vsel %vm582, %v1577, 0
        %v1620 = vsel %vm582, %v1578, 0
        %v1623 = vsel %vm582, %v1579, 0
        %v1626 = vsel %vm582, %v1580, 0
        %v1629 = vsel %vm582, %v1581, 0
        %v1632 = vsel %vm582, %v1582, 0
        %v1635 = vsel %vm582, %v1583, 0
        %v1638 = vsel %vm582, %v1584, 0
        %v1641 = vsel %vm582, %v1585, 0
        %v1644 = vsel %vm582, %v1586, 0
        %v1647 = vsel %vm582, %v1587, 0
        %v1650 = vsel %vm582, %v1588, 0
        %v1653 = vsel %vm582, %v1589, 0
        %1655 = vmatpush.bf16.msra.mxu0 0
        %1656 = vmatpush.bf16.msra.mxu0 0
        %1657 = vmatpush.bf16.msra.mxu0 0
        %1658 = vmatpush.bf16.msra.mxu0 0
        %1659 = vmatpush.bf16.msra.mxu0 0
        %1660 = vmatpush.bf16.msra.mxu0 0
        %1661 = vmatpush.bf16.msra.mxu0 %v1604
        %1662 = vmatpush.bf16.msra.mxu0 %v1603
        %1663 = vmatmul.bf16.gmra.mxu0 %v1608
        %v1664 = vpop.f32.mrf.mxu0
        %v1665 = vadd.f32 0.0, %v1664
        %v1666 = vpop.f32.mrf.mxu0
        %v1667 = vadd.f32 0.0, %v1666
        %1668 = vmatmul.bf16.gmra.mxu0 %v1611
        %v1669 = vpop.f32.mrf.mxu0
        %v1670 = vadd.f32 0.0, %v1669
        %v1671 = vpop.f32.mrf.mxu0
        %v1672 = vadd.f32 0.0, %v1671
        %1673 = vmatmul.bf16.gmra.mxu0 %v1614
        %v1674 = vpop.f32.mrf.mxu0
        %v1675 = vadd.f32 0.0, %v1674
        %v1676 = vpop.f32.mrf.mxu0
        %v1677 = vadd.f32 0.0, %v1676
        %1678 = vmatmul.bf16.gmra.mxu0 %v1617
        %v1679 = vpop.f32.mrf.mxu0
        %v1680 = vadd.f32 0.0, %v1679
        %v1681 = vpop.f32.mrf.mxu0
        %v1682 = vadd.f32 0.0, %v1681
        %1683 = vmatmul.bf16.gmra.mxu0 %v1620
        %v1684 = vpop.f32.mrf.mxu0
        %v1685 = vadd.f32 0.0, %v1684
        %v1686 = vpop.f32.mrf.mxu0
        %v1687 = vadd.f32 0.0, %v1686
        %1688 = vmatmul.bf16.gmra.mxu0 %v1623
        %v1689 = vpop.f32.mrf.mxu0
        %v1690 = vadd.f32 0.0, %v1689
        %v1691 = vpop.f32.mrf.mxu0
        %v1692 = vadd.f32 0.0, %v1691
        %1693 = vmatmul.bf16.gmra.mxu0 %v1626
        %v1694 = vpop.f32.mrf.mxu0
        %v1695 = vadd.f32 0.0, %v1694
        %v1696 = vpop.f32.mrf.mxu0
        %v1697 = vadd.f32 0.0, %v1696
        %1698 = vmatmul.bf16.gmra.mxu0 %v1629
        %v1699 = vpop.f32.mrf.mxu0
        %v1700 = vadd.f32 0.0, %v1699
        %v1701 = vpop.f32.mrf.mxu0
        %v1702 = vadd.f32 0.0, %v1701
        %1703 = vmatmul.bf16.gmra.mxu0 %v1632
        %v1704 = vpop.f32.mrf.mxu0
        %v1705 = vadd.f32 0.0, %v1704
        %v1706 = vpop.f32.mrf.mxu0
        %v1707 = vadd.f32 0.0, %v1706
        %1708 = vmatmul.bf16.gmra.mxu0 %v1635
        %v1709 = vpop.f32.mrf.mxu0
        %v1710 = vadd.f32 0.0, %v1709
        %v1711 = vpop.f32.mrf.mxu0
        %v1712 = vadd.f32 0.0, %v1711
        %1713 = vmatmul.bf16.gmra.mxu0 %v1638
        %v1714 = vpop.f32.mrf.mxu0
        %v1715 = vadd.f32 0.0, %v1714
        %v1716 = vpop.f32.mrf.mxu0
        %v1717 = vadd.f32 0.0, %v1716
        %1718 = vmatmul.bf16.gmra.mxu0 %v1641
        %v1719 = vpop.f32.mrf.mxu0
        %v1720 = vadd.f32 0.0, %v1719
        %v1721 = vpop.f32.mrf.mxu0
        %v1722 = vadd.f32 0.0, %v1721
        %1723 = vmatmul.bf16.gmra.mxu0 %v1644
        %v1724 = vpop.f32.mrf.mxu0
        %v1725 = vadd.f32 0.0, %v1724
        %v1726 = vpop.f32.mrf.mxu0
        %v1727 = vadd.f32 0.0, %v1726
        %1728 = vmatmul.bf16.gmra.mxu0 %v1647
        %v1729 = vpop.f32.mrf.mxu0
        %v1730 = vadd.f32 0.0, %v1729
        %v1731 = vpop.f32.mrf.mxu0
        %v1732 = vadd.f32 0.0, %v1731
        %1733 = vmatmul.bf16.gmra.mxu0 %v1650
        %v1734 = vpop.f32.mrf.mxu0
        %v1735 = vadd.f32 0.0, %v1734
        %v1736 = vpop.f32.mrf.mxu0
        %v1737 = vadd.f32 0.0, %v1736
        %1738 = vmatmul.bf16.gmra.mxu0 %v1653
        %v1739 = vpop.f32.mrf.mxu0
        %v1740 = vadd.f32 0.0, %v1739
        %v1741 = vpop.f32.mrf.mxu0
        %v1742 = vadd.f32 0.0, %v1741
        %1743 = vdwg.mxu0
        %v1744 = vadd.f32 %v1510, %v1665
        %v1745 = vadd.f32 %v1511, %v1667
        %v1746 = vadd.f32 %v1512, %v1670
        %v1747 = vadd.f32 %v1513, %v1672
        %v1748 = vadd.f32 %v1514, %v1675
        %v1749 = vadd.f32 %v1515, %v1677
        %v1750 = vadd.f32 %v1516, %v1680
        %v1751 = vadd.f32 %v1517, %v1682
        %v1752 = vadd.f32 %v1518, %v1685
        %v1753 = vadd.f32 %v1519, %v1687
        %v1754 = vadd.f32 %v1520, %v1690
        %v1755 = vadd.f32 %v1521, %v1692
        %v1756 = vadd.f32 %v1522, %v1695
        %v1757 = vadd.f32 %v1523, %v1697
        %v1758 = vadd.f32 %v1524, %v1700
        %v1759 = vadd.f32 %v1525, %v1702
        %v1760 = vadd.f32 %v1526, %v1705
        %v1761 = vadd.f32 %v1527, %v1707
        %v1762 = vadd.f32 %v1528, %v1710
        %v1763 = vadd.f32 %v1529, %v1712
        %v1764 = vadd.f32 %v1530, %v1715
        %v1765 = vadd.f32 %v1531, %v1717
        %v1766 = vadd.f32 %v1532, %v1720
        %v1767 = vadd.f32 %v1533, %v1722
        %v1768 = vadd.f32 %v1534, %v1725
        %v1769 = vadd.f32 %v1535, %v1727
        %v1770 = vadd.f32 %v1536, %v1730
        %v1771 = vadd.f32 %v1537, %v1732
        %v1772 = vadd.f32 %v1538, %v1735
        %v1773 = vadd.f32 %v1539, %v1737
        %v1774 = vadd.f32 %v1540, %v1740
        %v1775 = vadd.f32 %v1541, %v1742
        %v1776 = vld [vmem:[%s638 + $0x2] sm:$0xff]
        %v1777 = vld [vmem:[%s638 + $0xa] sm:$0xff]
        %v1778 = vld [vmem:[%s638 + $0x1a] sm:$0xff]
        %v1779 = vld [vmem:[%s638 + $0x22] sm:$0xff]
        %v1780 = vld [vmem:[%s638 + $0x32] sm:$0xff]
        %v1781 = vld [vmem:[%s638 + $0x3a] sm:$0xff]
        %v1782 = vld [vmem:[%s638 + $0x4a] sm:$0xff]
        %v1783 = vld [vmem:[%s638 + $0x52] sm:$0xff]
        %v1784 = vld [vmem:[%s638 + $0x62] sm:$0xff]
        %v1785 = vld [vmem:[%s638 + $0x6a] sm:$0xff]
        %v1786 = vld [vmem:[%s638 + $0x7a] sm:$0xff]
        %v1787 = vld [vmem:[%s638 + $0x82] sm:$0xff]
        %v1788 = vld [vmem:[%s638 + $0x92] sm:$0xff]
        %v1789 = vld [vmem:[%s638 + $0x9a] sm:$0xff]
        %v1790 = vld [vmem:[%s638 + $0xaa] sm:$0xff]
        %v1791 = vld [vmem:[%s638 + $0xb2] sm:$0xff]
        %v1792 = vld [vmem:[%s638 + $0xc2] sm:$0xff]
        %v1793 = vld [vmem:[%s638 + $0xca] sm:$0xff]
        %v1794 = vld [vmem:[%s638 + $0xda] sm:$0xff]
        %v1795 = vld [vmem:[%s638 + $0xe2] sm:$0xff]
        %v1796 = vld [vmem:[%s638 + $0xf2] sm:$0xff]
        %v1797 = vld [vmem:[%s638 + $0xfa] sm:$0xff]
        %v1798 = vld [vmem:[%s638 + $0x10a] sm:$0xff]
        %v1799 = vld [vmem:[%s638 + $0x112] sm:$0xff]
        %v1800 = vld [vmem:[%s638 + $0x122] sm:$0xff]
        %v1801 = vld [vmem:[%s638 + $0x12a] sm:$0xff]
        %v1802 = vld [vmem:[%s638 + $0x13a] sm:$0xff]
        %v1803 = vld [vmem:[%s638 + $0x142] sm:$0xff]
        %v1804 = vld [vmem:[%s638 + $0x152] sm:$0xff]
        %v1805 = vld [vmem:[%s638 + $0x15a] sm:$0xff]
        %v1806 = vld [vmem:[%s638 + $0x16a] sm:$0xff]
        %v1807 = vld [vmem:[%s638 + $0x172] sm:$0xff]
        %v1808 = vpack.c.bf16 %v1777, %v1776
        %v1809 = vpack.c.bf16 %v1779, %v1778
        %v1810 = vpack.c.bf16 %v1781, %v1780
        %v1811 = vpack.c.bf16 %v1783, %v1782
        %v1812 = vpack.c.bf16 %v1785, %v1784
        %v1813 = vpack.c.bf16 %v1787, %v1786
        %v1814 = vpack.c.bf16 %v1789, %v1788
        %v1815 = vpack.c.bf16 %v1791, %v1790
        %v1816 = vpack.c.bf16 %v1793, %v1792
        %v1817 = vpack.c.bf16 %v1795, %v1794
        %v1818 = vpack.c.bf16 %v1797, %v1796
        %v1819 = vpack.c.bf16 %v1799, %v1798
        %v1820 = vpack.c.bf16 %v1801, %v1800
        %v1821 = vpack.c.bf16 %v1803, %v1802
        %v1822 = vpack.c.bf16 %v1805, %v1804
        %v1823 = vpack.c.bf16 %v1807, %v1806
        %s1824 = scalar_lea.vmem %s5, 80
        %v1825 = vld [vmem:[%s1824] sm:$0xf]
        %v1826 = vld [vmem:[%s1824 + $0x4] sm:$0xf]
        %v1827 = vld [vmem:[%s1824 + $0x8] sm:$0xf]
        %v1828 = vld [vmem:[%s1824 + $0xc] sm:$0xf]
        %v1833 = vunpack.c.l.b16 %v1825
        %v1834 = vunpack.c.l.b16 %v1826
        %v1835 = vunpack.c.l.b16 %v1827
        %v1836 = vunpack.c.l.b16 %v1828
        %v1837 = vpack.c.b16 %v1834, %v1833
        %v1838 = vpack.c.b16 %v1836, %v1835
        %v1842 = vsel %vm582, %v1808, 0
        %v1845 = vsel %vm582, %v1809, 0
        %v1848 = vsel %vm582, %v1810, 0
        %v1851 = vsel %vm582, %v1811, 0
        %v1854 = vsel %vm582, %v1812, 0
        %v1857 = vsel %vm582, %v1813, 0
        %v1860 = vsel %vm582, %v1814, 0
        %v1863 = vsel %vm582, %v1815, 0
        %v1866 = vsel %vm582, %v1816, 0
        %v1869 = vsel %vm582, %v1817, 0
        %v1872 = vsel %vm582, %v1818, 0
        %v1875 = vsel %vm582, %v1819, 0
        %v1878 = vsel %vm582, %v1820, 0
        %v1881 = vsel %vm582, %v1821, 0
        %v1884 = vsel %vm582, %v1822, 0
        %v1887 = vsel %vm582, %v1823, 0
        %1889 = vmatpush.bf16.msra.mxu0 0
        %1890 = vmatpush.bf16.msra.mxu0 0
        %1891 = vmatpush.bf16.msra.mxu0 0
        %1892 = vmatpush.bf16.msra.mxu0 0
        %1893 = vmatpush.bf16.msra.mxu0 0
        %1894 = vmatpush.bf16.msra.mxu0 0
        %1895 = vmatpush.bf16.msra.mxu0 %v1838
        %1896 = vmatpush.bf16.msra.mxu0 %v1837
        %1897 = vmatmul.bf16.gmra.mxu0 %v1842
        %v1898 = vpop.f32.mrf.mxu0
        %v1899 = vadd.f32 0.0, %v1898
        %v1900 = vpop.f32.mrf.mxu0
        %v1901 = vadd.f32 0.0, %v1900
        %1902 = vmatmul.bf16.gmra.mxu0 %v1845
        %v1903 = vpop.f32.mrf.mxu0
        %v1904 = vadd.f32 0.0, %v1903
        %v1905 = vpop.f32.mrf.mxu0
        %v1906 = vadd.f32 0.0, %v1905
        %1907 = vmatmul.bf16.gmra.mxu0 %v1848
        %v1908 = vpop.f32.mrf.mxu0
        %v1909 = vadd.f32 0.0, %v1908
        %v1910 = vpop.f32.mrf.mxu0
        %v1911 = vadd.f32 0.0, %v1910
        %1912 = vmatmul.bf16.gmra.mxu0 %v1851
        %v1913 = vpop.f32.mrf.mxu0
        %v1914 = vadd.f32 0.0, %v1913
        %v1915 = vpop.f32.mrf.mxu0
        %v1916 = vadd.f32 0.0, %v1915
        %1917 = vmatmul.bf16.gmra.mxu0 %v1854
        %v1918 = vpop.f32.mrf.mxu0
        %v1919 = vadd.f32 0.0, %v1918
        %v1920 = vpop.f32.mrf.mxu0
        %v1921 = vadd.f32 0.0, %v1920
        %1922 = vmatmul.bf16.gmra.mxu0 %v1857
        %v1923 = vpop.f32.mrf.mxu0
        %v1924 = vadd.f32 0.0, %v1923
        %v1925 = vpop.f32.mrf.mxu0
        %v1926 = vadd.f32 0.0, %v1925
        %1927 = vmatmul.bf16.gmra.mxu0 %v1860
        %v1928 = vpop.f32.mrf.mxu0
        %v1929 = vadd.f32 0.0, %v1928
        %v1930 = vpop.f32.mrf.mxu0
        %v1931 = vadd.f32 0.0, %v1930
        %1932 = vmatmul.bf16.gmra.mxu0 %v1863
        %v1933 = vpop.f32.mrf.mxu0
        %v1934 = vadd.f32 0.0, %v1933
        %v1935 = vpop.f32.mrf.mxu0
        %v1936 = vadd.f32 0.0, %v1935
        %1937 = vmatmul.bf16.gmra.mxu0 %v1866
        %v1938 = vpop.f32.mrf.mxu0
        %v1939 = vadd.f32 0.0, %v1938
        %v1940 = vpop.f32.mrf.mxu0
        %v1941 = vadd.f32 0.0, %v1940
        %1942 = vmatmul.bf16.gmra.mxu0 %v1869
        %v1943 = vpop.f32.mrf.mxu0
        %v1944 = vadd.f32 0.0, %v1943
        %v1945 = vpop.f32.mrf.mxu0
        %v1946 = vadd.f32 0.0, %v1945
        %1947 = vmatmul.bf16.gmra.mxu0 %v1872
        %v1948 = vpop.f32.mrf.mxu0
        %v1949 = vadd.f32 0.0, %v1948
        %v1950 = vpop.f32.mrf.mxu0
        %v1951 = vadd.f32 0.0, %v1950
        %1952 = vmatmul.bf16.gmra.mxu0 %v1875
        %v1953 = vpop.f32.mrf.mxu0
        %v1954 = vadd.f32 0.0, %v1953
        %v1955 = vpop.f32.mrf.mxu0
        %v1956 = vadd.f32 0.0, %v1955
        %1957 = vmatmul.bf16.gmra.mxu0 %v1878
        %v1958 = vpop.f32.mrf.mxu0
        %v1959 = vadd.f32 0.0, %v1958
        %v1960 = vpop.f32.mrf.mxu0
        %v1961 = vadd.f32 0.0, %v1960
        %1962 = vmatmul.bf16.gmra.mxu0 %v1881
        %v1963 = vpop.f32.mrf.mxu0
        %v1964 = vadd.f32 0.0, %v1963
        %v1965 = vpop.f32.mrf.mxu0
        %v1966 = vadd.f32 0.0, %v1965
        %1967 = vmatmul.bf16.gmra.mxu0 %v1884
        %v1968 = vpop.f32.mrf.mxu0
        %v1969 = vadd.f32 0.0, %v1968
        %v1970 = vpop.f32.mrf.mxu0
        %v1971 = vadd.f32 0.0, %v1970
        %1972 = vmatmul.bf16.gmra.mxu0 %v1887
        %v1973 = vpop.f32.mrf.mxu0
        %v1974 = vadd.f32 0.0, %v1973
        %v1975 = vpop.f32.mrf.mxu0
        %v1976 = vadd.f32 0.0, %v1975
        %1977 = vdwg.mxu0
        %v1978 = vadd.f32 %v1744, %v1899
        %v1979 = vadd.f32 %v1745, %v1901
        %v1980 = vadd.f32 %v1746, %v1904
        %v1981 = vadd.f32 %v1747, %v1906
        %v1982 = vadd.f32 %v1748, %v1909
        %v1983 = vadd.f32 %v1749, %v1911
        %v1984 = vadd.f32 %v1750, %v1914
        %v1985 = vadd.f32 %v1751, %v1916
        %v1986 = vadd.f32 %v1752, %v1919
        %v1987 = vadd.f32 %v1753, %v1921
        %v1988 = vadd.f32 %v1754, %v1924
        %v1989 = vadd.f32 %v1755, %v1926
        %v1990 = vadd.f32 %v1756, %v1929
        %v1991 = vadd.f32 %v1757, %v1931
        %v1992 = vadd.f32 %v1758, %v1934
        %v1993 = vadd.f32 %v1759, %v1936
        %v1994 = vadd.f32 %v1760, %v1939
        %v1995 = vadd.f32 %v1761, %v1941
        %v1996 = vadd.f32 %v1762, %v1944
        %v1997 = vadd.f32 %v1763, %v1946
        %v1998 = vadd.f32 %v1764, %v1949
        %v1999 = vadd.f32 %v1765, %v1951
        %v2000 = vadd.f32 %v1766, %v1954
        %v2001 = vadd.f32 %v1767, %v1956
        %v2002 = vadd.f32 %v1768, %v1959
        %v2003 = vadd.f32 %v1769, %v1961
        %v2004 = vadd.f32 %v1770, %v1964
        %v2005 = vadd.f32 %v1771, %v1966
        %v2006 = vadd.f32 %v1772, %v1969
        %v2007 = vadd.f32 %v1773, %v1971
        %v2008 = vadd.f32 %v1774, %v1974
        %v2009 = vadd.f32 %v1775, %v1976
        %s2010 = scalar_lea.vmem [#allocation2], 48
        %v2011 = vld [vmem:[%s2010] sm:$0xff]
        %v2012 = vld [vmem:[%s2010 + $0x8] sm:$0xff]
        %v2013 = vld [vmem:[%s2010 + $0x18] sm:$0xff]
        %v2014 = vld [vmem:[%s2010 + $0x20] sm:$0xff]
        %v2015 = vld [vmem:[%s2010 + $0x30] sm:$0xff]
        %v2016 = vld [vmem:[%s2010 + $0x38] sm:$0xff]
        %v2017 = vld [vmem:[%s2010 + $0x48] sm:$0xff]
        %v2018 = vld [vmem:[%s2010 + $0x50] sm:$0xff]
        %v2019 = vld [vmem:[%s2010 + $0x60] sm:$0xff]
        %v2020 = vld [vmem:[%s2010 + $0x68] sm:$0xff]
        %v2021 = vld [vmem:[%s2010 + $0x78] sm:$0xff]
        %v2022 = vld [vmem:[%s2010 + $0x80] sm:$0xff]
        %v2023 = vld [vmem:[%s2010 + $0x90] sm:$0xff]
        %v2024 = vld [vmem:[%s2010 + $0x98] sm:$0xff]
        %v2025 = vld [vmem:[%s2010 + $0xa8] sm:$0xff]
        %v2026 = vld [vmem:[%s2010 + $0xb0] sm:$0xff]
        %v2027 = vld [vmem:[%s2010 + $0xc0] sm:$0xff]
        %v2028 = vld [vmem:[%s2010 + $0xc8] sm:$0xff]
        %v2029 = vld [vmem:[%s2010 + $0xd8] sm:$0xff]
        %v2030 = vld [vmem:[%s2010 + $0xe0] sm:$0xff]
        %v2031 = vld [vmem:[%s2010 + $0xf0] sm:$0xff]
        %v2032 = vld [vmem:[%s2010 + $0xf8] sm:$0xff]
        %v2033 = vld [vmem:[%s2010 + $0x108] sm:$0xff]
        %v2034 = vld [vmem:[%s2010 + $0x110] sm:$0xff]
        %v2035 = vld [vmem:[%s2010 + $0x120] sm:$0xff]
        %v2036 = vld [vmem:[%s2010 + $0x128] sm:$0xff]
        %v2037 = vld [vmem:[%s2010 + $0x138] sm:$0xff]
        %v2038 = vld [vmem:[%s2010 + $0x140] sm:$0xff]
        %v2039 = vld [vmem:[%s2010 + $0x150] sm:$0xff]
        %v2040 = vld [vmem:[%s2010 + $0x158] sm:$0xff]
        %v2041 = vld [vmem:[%s2010 + $0x168] sm:$0xff]
        %v2042 = vld [vmem:[%s2010 + $0x170] sm:$0xff]
        %v2043 = vpack.c.bf16 %v2012, %v2011
        %v2044 = vpack.c.bf16 %v2014, %v2013
        %v2045 = vpack.c.bf16 %v2016, %v2015
        %v2046 = vpack.c.bf16 %v2018, %v2017
        %v2047 = vpack.c.bf16 %v2020, %v2019
        %v2048 = vpack.c.bf16 %v2022, %v2021
        %v2049 = vpack.c.bf16 %v2024, %v2023
        %v2050 = vpack.c.bf16 %v2026, %v2025
        %v2051 = vpack.c.bf16 %v2028, %v2027
        %v2052 = vpack.c.bf16 %v2030, %v2029
        %v2053 = vpack.c.bf16 %v2032, %v2031
        %v2054 = vpack.c.bf16 %v2034, %v2033
        %v2055 = vpack.c.bf16 %v2036, %v2035
        %v2056 = vpack.c.bf16 %v2038, %v2037
        %v2057 = vpack.c.bf16 %v2040, %v2039
        %v2058 = vpack.c.bf16 %v2042, %v2041
        %s2059 = scalar_lea.vmem %s5, 96
        %v2060 = vld [vmem:[%s2059] sm:$0xf]
        %v2061 = vld [vmem:[%s2059 + $0x4] sm:$0xf]
        %v2062 = vld [vmem:[%s2059 + $0x8] sm:$0xf]
        %v2063 = vld [vmem:[%s2059 + $0xc] sm:$0xf]
        %v2068 = vunpack.c.l.b16 %v2060
        %v2069 = vunpack.c.l.b16 %v2061
        %v2070 = vunpack.c.l.b16 %v2062
        %v2071 = vunpack.c.l.b16 %v2063
        %v2072 = vpack.c.b16 %v2069, %v2068
        %v2073 = vpack.c.b16 %v2071, %v2070
        %v2077 = vsel %vm582, %v2043, 0
        %v2080 = vsel %vm582, %v2044, 0
        %v2083 = vsel %vm582, %v2045, 0
        %v2086 = vsel %vm582, %v2046, 0
        %v2089 = vsel %vm582, %v2047, 0
        %v2092 = vsel %vm582, %v2048, 0
        %v2095 = vsel %vm582, %v2049, 0
        %v2098 = vsel %vm582, %v2050, 0
        %v2101 = vsel %vm582, %v2051, 0
        %v2104 = vsel %vm582, %v2052, 0
        %v2107 = vsel %vm582, %v2053, 0
        %v2110 = vsel %vm582, %v2054, 0
        %v2113 = vsel %vm582, %v2055, 0
        %v2116 = vsel %vm582, %v2056, 0
        %v2119 = vsel %vm582, %v2057, 0
        %v2122 = vsel %vm582, %v2058, 0
        %2124 = vmatpush.bf16.msra.mxu0 0
        %2125 = vmatpush.bf16.msra.mxu0 0
        %2126 = vmatpush.bf16.msra.mxu0 0
        %2127 = vmatpush.bf16.msra.mxu0 0
        %2128 = vmatpush.bf16.msra.mxu0 0
        %2129 = vmatpush.bf16.msra.mxu0 0
        %2130 = vmatpush.bf16.msra.mxu0 %v2073
        %2131 = vmatpush.bf16.msra.mxu0 %v2072
        %2132 = vmatmul.bf16.gmra.mxu0 %v2077
        %v2133 = vpop.f32.mrf.mxu0
        %v2134 = vadd.f32 0.0, %v2133
        %v2135 = vpop.f32.mrf.mxu0
        %v2136 = vadd.f32 0.0, %v2135
        %2137 = vmatmul.bf16.gmra.mxu0 %v2080
        %v2138 = vpop.f32.mrf.mxu0
        %v2139 = vadd.f32 0.0, %v2138
        %v2140 = vpop.f32.mrf.mxu0
        %v2141 = vadd.f32 0.0, %v2140
        %2142 = vmatmul.bf16.gmra.mxu0 %v2083
        %v2143 = vpop.f32.mrf.mxu0
        %v2144 = vadd.f32 0.0, %v2143
        %v2145 = vpop.f32.mrf.mxu0
        %v2146 = vadd.f32 0.0, %v2145
        %2147 = vmatmul.bf16.gmra.mxu0 %v2086
        %v2148 = vpop.f32.mrf.mxu0
        %v2149 = vadd.f32 0.0, %v2148
        %v2150 = vpop.f32.mrf.mxu0
        %v2151 = vadd.f32 0.0, %v2150
        %2152 = vmatmul.bf16.gmra.mxu0 %v2089
        %v2153 = vpop.f32.mrf.mxu0
        %v2154 = vadd.f32 0.0, %v2153
        %v2155 = vpop.f32.mrf.mxu0
        %v2156 = vadd.f32 0.0, %v2155
        %2157 = vmatmul.bf16.gmra.mxu0 %v2092
        %v2158 = vpop.f32.mrf.mxu0
        %v2159 = vadd.f32 0.0, %v2158
        %v2160 = vpop.f32.mrf.mxu0
        %v2161 = vadd.f32 0.0, %v2160
        %2162 = vmatmul.bf16.gmra.mxu0 %v2095
        %v2163 = vpop.f32.mrf.mxu0
        %v2164 = vadd.f32 0.0, %v2163
        %v2165 = vpop.f32.mrf.mxu0
        %v2166 = vadd.f32 0.0, %v2165
        %2167 = vmatmul.bf16.gmra.mxu0 %v2098
        %v2168 = vpop.f32.mrf.mxu0
        %v2169 = vadd.f32 0.0, %v2168
        %v2170 = vpop.f32.mrf.mxu0
        %v2171 = vadd.f32 0.0, %v2170
        %2172 = vmatmul.bf16.gmra.mxu0 %v2101
        %v2173 = vpop.f32.mrf.mxu0
        %v2174 = vadd.f32 0.0, %v2173
        %v2175 = vpop.f32.mrf.mxu0
        %v2176 = vadd.f32 0.0, %v2175
        %2177 = vmatmul.bf16.gmra.mxu0 %v2104
        %v2178 = vpop.f32.mrf.mxu0
        %v2179 = vadd.f32 0.0, %v2178
        %v2180 = vpop.f32.mrf.mxu0
        %v2181 = vadd.f32 0.0, %v2180
        %2182 = vmatmul.bf16.gmra.mxu0 %v2107
        %v2183 = vpop.f32.mrf.mxu0
        %v2184 = vadd.f32 0.0, %v2183
        %v2185 = vpop.f32.mrf.mxu0
        %v2186 = vadd.f32 0.0, %v2185
        %2187 = vmatmul.bf16.gmra.mxu0 %v2110
        %v2188 = vpop.f32.mrf.mxu0
        %v2189 = vadd.f32 0.0, %v2188
        %v2190 = vpop.f32.mrf.mxu0
        %v2191 = vadd.f32 0.0, %v2190
        %2192 = vmatmul.bf16.gmra.mxu0 %v2113
        %v2193 = vpop.f32.mrf.mxu0
        %v2194 = vadd.f32 0.0, %v2193
        %v2195 = vpop.f32.mrf.mxu0
        %v2196 = vadd.f32 0.0, %v2195
        %2197 = vmatmul.bf16.gmra.mxu0 %v2116
        %v2198 = vpop.f32.mrf.mxu0
        %v2199 = vadd.f32 0.0, %v2198
        %v2200 = vpop.f32.mrf.mxu0
        %v2201 = vadd.f32 0.0, %v2200
        %2202 = vmatmul.bf16.gmra.mxu0 %v2119
        %v2203 = vpop.f32.mrf.mxu0
        %v2204 = vadd.f32 0.0, %v2203
        %v2205 = vpop.f32.mrf.mxu0
        %v2206 = vadd.f32 0.0, %v2205
        %2207 = vmatmul.bf16.gmra.mxu0 %v2122
        %v2208 = vpop.f32.mrf.mxu0
        %v2209 = vadd.f32 0.0, %v2208
        %v2210 = vpop.f32.mrf.mxu0
        %v2211 = vadd.f32 0.0, %v2210
        %2212 = vdwg.mxu0
        %v2213 = vadd.f32 %v1978, %v2134
        %v2214 = vadd.f32 %v1979, %v2136
        %v2215 = vadd.f32 %v1980, %v2139
        %v2216 = vadd.f32 %v1981, %v2141
        %v2217 = vadd.f32 %v1982, %v2144
        %v2218 = vadd.f32 %v1983, %v2146
        %v2219 = vadd.f32 %v1984, %v2149
        %v2220 = vadd.f32 %v1985, %v2151
        %v2221 = vadd.f32 %v1986, %v2154
        %v2222 = vadd.f32 %v1987, %v2156
        %v2223 = vadd.f32 %v1988, %v2159
        %v2224 = vadd.f32 %v1989, %v2161
        %v2225 = vadd.f32 %v1990, %v2164
        %v2226 = vadd.f32 %v1991, %v2166
        %v2227 = vadd.f32 %v1992, %v2169
        %v2228 = vadd.f32 %v1993, %v2171
        %v2229 = vadd.f32 %v1994, %v2174
        %v2230 = vadd.f32 %v1995, %v2176
        %v2231 = vadd.f32 %v1996, %v2179
        %v2232 = vadd.f32 %v1997, %v2181
        %v2233 = vadd.f32 %v1998, %v2184
        %v2234 = vadd.f32 %v1999, %v2186
        %v2235 = vadd.f32 %v2000, %v2189
        %v2236 = vadd.f32 %v2001, %v2191
        %v2237 = vadd.f32 %v2002, %v2194
        %v2238 = vadd.f32 %v2003, %v2196
        %v2239 = vadd.f32 %v2004, %v2199
        %v2240 = vadd.f32 %v2005, %v2201
        %v2241 = vadd.f32 %v2006, %v2204
        %v2242 = vadd.f32 %v2007, %v2206
        %v2243 = vadd.f32 %v2008, %v2209
        %v2244 = vadd.f32 %v2009, %v2211
        %v2245 = vld [vmem:[%s2010 + $0x1] sm:$0xff]
        %v2246 = vld [vmem:[%s2010 + $0x9] sm:$0xff]
        %v2247 = vld [vmem:[%s2010 + $0x19] sm:$0xff]
        %v2248 = vld [vmem:[%s2010 + $0x21] sm:$0xff]
        %v2249 = vld [vmem:[%s2010 + $0x31] sm:$0xff]
        %v2250 = vld [vmem:[%s2010 + $0x39] sm:$0xff]
        %v2251 = vld [vmem:[%s2010 + $0x49] sm:$0xff]
        %v2252 = vld [vmem:[%s2010 + $0x51] sm:$0xff]
        %v2253 = vld [vmem:[%s2010 + $0x61] sm:$0xff]
        %v2254 = vld [vmem:[%s2010 + $0x69] sm:$0xff]
        %v2255 = vld [vmem:[%s2010 + $0x79] sm:$0xff]
        %v2256 = vld [vmem:[%s2010 + $0x81] sm:$0xff]
        %v2257 = vld [vmem:[%s2010 + $0x91] sm:$0xff]
        %v2258 = vld [vmem:[%s2010 + $0x99] sm:$0xff]
        %v2259 = vld [vmem:[%s2010 + $0xa9] sm:$0xff]
        %v2260 = vld [vmem:[%s2010 + $0xb1] sm:$0xff]
        %v2261 = vld [vmem:[%s2010 + $0xc1] sm:$0xff]
        %v2262 = vld [vmem:[%s2010 + $0xc9] sm:$0xff]
        %v2263 = vld [vmem:[%s2010 + $0xd9] sm:$0xff]
        %v2264 = vld [vmem:[%s2010 + $0xe1] sm:$0xff]
        %v2265 = vld [vmem:[%s2010 + $0xf1] sm:$0xff]
        %v2266 = vld [vmem:[%s2010 + $0xf9] sm:$0xff]
        %v2267 = vld [vmem:[%s2010 + $0x109] sm:$0xff]
        %v2268 = vld [vmem:[%s2010 + $0x111] sm:$0xff]
        %v2269 = vld [vmem:[%s2010 + $0x121] sm:$0xff]
        %v2270 = vld [vmem:[%s2010 + $0x129] sm:$0xff]
        %v2271 = vld [vmem:[%s2010 + $0x139] sm:$0xff]
        %v2272 = vld [vmem:[%s2010 + $0x141] sm:$0xff]
        %v2273 = vld [vmem:[%s2010 + $0x151] sm:$0xff]
        %v2274 = vld [vmem:[%s2010 + $0x159] sm:$0xff]
        %v2275 = vld [vmem:[%s2010 + $0x169] sm:$0xff]
        %v2276 = vld [vmem:[%s2010 + $0x171] sm:$0xff]
        %v2277 = vpack.c.bf16 %v2246, %v2245
        %v2278 = vpack.c.bf16 %v2248, %v2247
        %v2279 = vpack.c.bf16 %v2250, %v2249
        %v2280 = vpack.c.bf16 %v2252, %v2251
        %v2281 = vpack.c.bf16 %v2254, %v2253
        %v2282 = vpack.c.bf16 %v2256, %v2255
        %v2283 = vpack.c.bf16 %v2258, %v2257
        %v2284 = vpack.c.bf16 %v2260, %v2259
        %v2285 = vpack.c.bf16 %v2262, %v2261
        %v2286 = vpack.c.bf16 %v2264, %v2263
        %v2287 = vpack.c.bf16 %v2266, %v2265
        %v2288 = vpack.c.bf16 %v2268, %v2267
        %v2289 = vpack.c.bf16 %v2270, %v2269
        %v2290 = vpack.c.bf16 %v2272, %v2271
        %v2291 = vpack.c.bf16 %v2274, %v2273
        %v2292 = vpack.c.bf16 %v2276, %v2275
        %s2293 = scalar_lea.vmem %s5, 112
        %v2294 = vld [vmem:[%s2293] sm:$0xf]
        %v2295 = vld [vmem:[%s2293 + $0x4] sm:$0xf]
        %v2296 = vld [vmem:[%s2293 + $0x8] sm:$0xf]
        %v2297 = vld [vmem:[%s2293 + $0xc] sm:$0xf]
        %v2302 = vunpack.c.l.b16 %v2294
        %v2303 = vunpack.c.l.b16 %v2295
        %v2304 = vunpack.c.l.b16 %v2296
        %v2305 = vunpack.c.l.b16 %v2297
        %v2306 = vpack.c.b16 %v2303, %v2302
        %v2307 = vpack.c.b16 %v2305, %v2304
        %v2311 = vsel %vm582, %v2277, 0
        %v2314 = vsel %vm582, %v2278, 0
        %v2317 = vsel %vm582, %v2279, 0
        %v2320 = vsel %vm582, %v2280, 0
        %v2323 = vsel %vm582, %v2281, 0
        %v2326 = vsel %vm582, %v2282, 0
        %v2329 = vsel %vm582, %v2283, 0
        %v2332 = vsel %vm582, %v2284, 0
        %v2335 = vsel %vm582, %v2285, 0
        %v2338 = vsel %vm582, %v2286, 0
        %v2341 = vsel %vm582, %v2287, 0
        %v2344 = vsel %vm582, %v2288, 0
        %v2347 = vsel %vm582, %v2289, 0
        %v2350 = vsel %vm582, %v2290, 0
        %v2353 = vsel %vm582, %v2291, 0
        %v2356 = vsel %vm582, %v2292, 0
        %2358 = vmatpush.bf16.msra.mxu0 0
        %2359 = vmatpush.bf16.msra.mxu0 0
        %2360 = vmatpush.bf16.msra.mxu0 0
        %2361 = vmatpush.bf16.msra.mxu0 0
        %2362 = vmatpush.bf16.msra.mxu0 0
        %2363 = vmatpush.bf16.msra.mxu0 0
        %2364 = vmatpush.bf16.msra.mxu0 %v2307
        %2365 = vmatpush.bf16.msra.mxu0 %v2306
        %2366 = vmatmul.bf16.gmra.mxu0 %v2311
        %v2367 = vpop.f32.mrf.mxu0
        %v2368 = vadd.f32 0.0, %v2367
        %v2369 = vpop.f32.mrf.mxu0
        %v2370 = vadd.f32 0.0, %v2369
        %2371 = vmatmul.bf16.gmra.mxu0 %v2314
        %v2372 = vpop.f32.mrf.mxu0
        %v2373 = vadd.f32 0.0, %v2372
        %v2374 = vpop.f32.mrf.mxu0
        %v2375 = vadd.f32 0.0, %v2374
        %2376 = vmatmul.bf16.gmra.mxu0 %v2317
        %v2377 = vpop.f32.mrf.mxu0
        %v2378 = vadd.f32 0.0, %v2377
        %v2379 = vpop.f32.mrf.mxu0
        %v2380 = vadd.f32 0.0, %v2379
        %2381 = vmatmul.bf16.gmra.mxu0 %v2320
        %v2382 = vpop.f32.mrf.mxu0
        %v2383 = vadd.f32 0.0, %v2382
        %v2384 = vpop.f32.mrf.mxu0
        %v2385 = vadd.f32 0.0, %v2384
        %2386 = vmatmul.bf16.gmra.mxu0 %v2323
        %v2387 = vpop.f32.mrf.mxu0
        %v2388 = vadd.f32 0.0, %v2387
        %v2389 = vpop.f32.mrf.mxu0
        %v2390 = vadd.f32 0.0, %v2389
        %2391 = vmatmul.bf16.gmra.mxu0 %v2326
        %v2392 = vpop.f32.mrf.mxu0
        %v2393 = vadd.f32 0.0, %v2392
        %v2394 = vpop.f32.mrf.mxu0
        %v2395 = vadd.f32 0.0, %v2394
        %2396 = vmatmul.bf16.gmra.mxu0 %v2329
        %v2397 = vpop.f32.mrf.mxu0
        %v2398 = vadd.f32 0.0, %v2397
        %v2399 = vpop.f32.mrf.mxu0
        %v2400 = vadd.f32 0.0, %v2399
        %2401 = vmatmul.bf16.gmra.mxu0 %v2332
        %v2402 = vpop.f32.mrf.mxu0
        %v2403 = vadd.f32 0.0, %v2402
        %v2404 = vpop.f32.mrf.mxu0
        %v2405 = vadd.f32 0.0, %v2404
        %2406 = vmatmul.bf16.gmra.mxu0 %v2335
        %v2407 = vpop.f32.mrf.mxu0
        %v2408 = vadd.f32 0.0, %v2407
        %v2409 = vpop.f32.mrf.mxu0
        %v2410 = vadd.f32 0.0, %v2409
        %2411 = vmatmul.bf16.gmra.mxu0 %v2338
        %v2412 = vpop.f32.mrf.mxu0
        %v2413 = vadd.f32 0.0, %v2412
        %v2414 = vpop.f32.mrf.mxu0
        %v2415 = vadd.f32 0.0, %v2414
        %2416 = vmatmul.bf16.gmra.mxu0 %v2341
        %v2417 = vpop.f32.mrf.mxu0
        %v2418 = vadd.f32 0.0, %v2417
        %v2419 = vpop.f32.mrf.mxu0
        %v2420 = vadd.f32 0.0, %v2419
        %2421 = vmatmul.bf16.gmra.mxu0 %v2344
        %v2422 = vpop.f32.mrf.mxu0
        %v2423 = vadd.f32 0.0, %v2422
        %v2424 = vpop.f32.mrf.mxu0
        %v2425 = vadd.f32 0.0, %v2424
        %2426 = vmatmul.bf16.gmra.mxu0 %v2347
        %v2427 = vpop.f32.mrf.mxu0
        %v2428 = vadd.f32 0.0, %v2427
        %v2429 = vpop.f32.mrf.mxu0
        %v2430 = vadd.f32 0.0, %v2429
        %2431 = vmatmul.bf16.gmra.mxu0 %v2350
        %v2432 = vpop.f32.mrf.mxu0
        %v2433 = vadd.f32 0.0, %v2432
        %v2434 = vpop.f32.mrf.mxu0
        %v2435 = vadd.f32 0.0, %v2434
        %2436 = vmatmul.bf16.gmra.mxu0 %v2353
        %v2437 = vpop.f32.mrf.mxu0
        %v2438 = vadd.f32 0.0, %v2437
        %v2439 = vpop.f32.mrf.mxu0
        %v2440 = vadd.f32 0.0, %v2439
        %2441 = vmatmul.bf16.gmra.mxu0 %v2356
        %v2442 = vpop.f32.mrf.mxu0
        %v2443 = vadd.f32 0.0, %v2442
        %v2444 = vpop.f32.mrf.mxu0
        %v2445 = vadd.f32 0.0, %v2444
        %2446 = vdwg.mxu0
        %v2447 = vadd.f32 %v2213, %v2368
        %v2448 = vadd.f32 %v2214, %v2370
        %v2449 = vadd.f32 %v2215, %v2373
        %v2450 = vadd.f32 %v2216, %v2375
        %v2451 = vadd.f32 %v2217, %v2378
        %v2452 = vadd.f32 %v2218, %v2380
        %v2453 = vadd.f32 %v2219, %v2383
        %v2454 = vadd.f32 %v2220, %v2385
        %v2455 = vadd.f32 %v2221, %v2388
        %v2456 = vadd.f32 %v2222, %v2390
        %v2457 = vadd.f32 %v2223, %v2393
        %v2458 = vadd.f32 %v2224, %v2395
        %v2459 = vadd.f32 %v2225, %v2398
        %v2460 = vadd.f32 %v2226, %v2400
        %v2461 = vadd.f32 %v2227, %v2403
        %v2462 = vadd.f32 %v2228, %v2405
        %v2463 = vadd.f32 %v2229, %v2408
        %v2464 = vadd.f32 %v2230, %v2410
        %v2465 = vadd.f32 %v2231, %v2413
        %v2466 = vadd.f32 %v2232, %v2415
        %v2467 = vadd.f32 %v2233, %v2418
        %v2468 = vadd.f32 %v2234, %v2420
        %v2469 = vadd.f32 %v2235, %v2423
        %v2470 = vadd.f32 %v2236, %v2425
        %v2471 = vadd.f32 %v2237, %v2428
        %v2472 = vadd.f32 %v2238, %v2430
        %v2473 = vadd.f32 %v2239, %v2433
        %v2474 = vadd.f32 %v2240, %v2435
        %v2475 = vadd.f32 %v2241, %v2438
        %v2476 = vadd.f32 %v2242, %v2440
        %v2477 = vadd.f32 %v2243, %v2443
        %v2478 = vadd.f32 %v2244, %v2445
        %v2479 = vld [vmem:[%s2010 + $0x2] sm:$0xff]
        %v2480 = vld [vmem:[%s2010 + $0xa] sm:$0xff]
        %v2481 = vld [vmem:[%s2010 + $0x1a] sm:$0xff]
        %v2482 = vld [vmem:[%s2010 + $0x22] sm:$0xff]
        %v2483 = vld [vmem:[%s2010 + $0x32] sm:$0xff]
        %v2484 = vld [vmem:[%s2010 + $0x3a] sm:$0xff]
        %v2485 = vld [vmem:[%s2010 + $0x4a] sm:$0xff]
        %v2486 = vld [vmem:[%s2010 + $0x52] sm:$0xff]
        %v2487 = vld [vmem:[%s2010 + $0x62] sm:$0xff]
        %v2488 = vld [vmem:[%s2010 + $0x6a] sm:$0xff]
        %v2489 = vld [vmem:[%s2010 + $0x7a] sm:$0xff]
        %v2490 = vld [vmem:[%s2010 + $0x82] sm:$0xff]
        %v2491 = vld [vmem:[%s2010 + $0x92] sm:$0xff]
        %v2492 = vld [vmem:[%s2010 + $0x9a] sm:$0xff]
        %v2493 = vld [vmem:[%s2010 + $0xaa] sm:$0xff]
        %v2494 = vld [vmem:[%s2010 + $0xb2] sm:$0xff]
        %v2495 = vld [vmem:[%s2010 + $0xc2] sm:$0xff]
        %v2496 = vld [vmem:[%s2010 + $0xca] sm:$0xff]
        %v2497 = vld [vmem:[%s2010 + $0xda] sm:$0xff]
        %v2498 = vld [vmem:[%s2010 + $0xe2] sm:$0xff]
        %v2499 = vld [vmem:[%s2010 + $0xf2] sm:$0xff]
        %v2500 = vld [vmem:[%s2010 + $0xfa] sm:$0xff]
        %v2501 = vld [vmem:[%s2010 + $0x10a] sm:$0xff]
        %v2502 = vld [vmem:[%s2010 + $0x112] sm:$0xff]
        %v2503 = vld [vmem:[%s2010 + $0x122] sm:$0xff]
        %v2504 = vld [vmem:[%s2010 + $0x12a] sm:$0xff]
        %v2505 = vld [vmem:[%s2010 + $0x13a] sm:$0xff]
        %v2506 = vld [vmem:[%s2010 + $0x142] sm:$0xff]
        %v2507 = vld [vmem:[%s2010 + $0x152] sm:$0xff]
        %v2508 = vld [vmem:[%s2010 + $0x15a] sm:$0xff]
        %v2509 = vld [vmem:[%s2010 + $0x16a] sm:$0xff]
        %v2510 = vld [vmem:[%s2010 + $0x172] sm:$0xff]
        %v2511 = vpack.c.bf16 %v2480, %v2479
        %v2512 = vpack.c.bf16 %v2482, %v2481
        %v2513 = vpack.c.bf16 %v2484, %v2483
        %v2514 = vpack.c.bf16 %v2486, %v2485
        %v2515 = vpack.c.bf16 %v2488, %v2487
        %v2516 = vpack.c.bf16 %v2490, %v2489
        %v2517 = vpack.c.bf16 %v2492, %v2491
        %v2518 = vpack.c.bf16 %v2494, %v2493
        %v2519 = vpack.c.bf16 %v2496, %v2495
        %v2520 = vpack.c.bf16 %v2498, %v2497
        %v2521 = vpack.c.bf16 %v2500, %v2499
        %v2522 = vpack.c.bf16 %v2502, %v2501
        %v2523 = vpack.c.bf16 %v2504, %v2503
        %v2524 = vpack.c.bf16 %v2506, %v2505
        %v2525 = vpack.c.bf16 %v2508, %v2507
        %v2526 = vpack.c.bf16 %v2510, %v2509
        %s2527 = scalar_lea.vmem %s5, 128
        %v2528 = vld [vmem:[%s2527] sm:$0xf]
        %v2529 = vld [vmem:[%s2527 + $0x4] sm:$0xf]
        %v2530 = vld [vmem:[%s2527 + $0x8] sm:$0xf]
        %v2531 = vld [vmem:[%s2527 + $0xc] sm:$0xf]
        %v2536 = vunpack.c.l.b16 %v2528
        %v2537 = vunpack.c.l.b16 %v2529
        %v2538 = vunpack.c.l.b16 %v2530
        %v2539 = vunpack.c.l.b16 %v2531
        %v2540 = vpack.c.b16 %v2537, %v2536
        %v2541 = vpack.c.b16 %v2539, %v2538
        %v2545 = vsel %vm582, %v2511, 0
        %v2548 = vsel %vm582, %v2512, 0
        %v2551 = vsel %vm582, %v2513, 0
        %v2554 = vsel %vm582, %v2514, 0
        %v2557 = vsel %vm582, %v2515, 0
        %v2560 = vsel %vm582, %v2516, 0
        %v2563 = vsel %vm582, %v2517, 0
        %v2566 = vsel %vm582, %v2518, 0
        %v2569 = vsel %vm582, %v2519, 0
        %v2572 = vsel %vm582, %v2520, 0
        %v2575 = vsel %vm582, %v2521, 0
        %v2578 = vsel %vm582, %v2522, 0
        %v2581 = vsel %vm582, %v2523, 0
        %v2584 = vsel %vm582, %v2524, 0
        %v2587 = vsel %vm582, %v2525, 0
        %v2590 = vsel %vm582, %v2526, 0
        %2592 = vmatpush.bf16.msra.mxu0 0
        %2593 = vmatpush.bf16.msra.mxu0 0
        %2594 = vmatpush.bf16.msra.mxu0 0
        %2595 = vmatpush.bf16.msra.mxu0 0
        %2596 = vmatpush.bf16.msra.mxu0 0
        %2597 = vmatpush.bf16.msra.mxu0 0
        %2598 = vmatpush.bf16.msra.mxu0 %v2541
        %2599 = vmatpush.bf16.msra.mxu0 %v2540
        %2600 = vmatmul.bf16.gmra.mxu0 %v2545
        %v2601 = vpop.f32.mrf.mxu0
        %v2602 = vadd.f32 0.0, %v2601
        %v2603 = vpop.f32.mrf.mxu0
        %v2604 = vadd.f32 0.0, %v2603
        %2605 = vmatmul.bf16.gmra.mxu0 %v2548
        %v2606 = vpop.f32.mrf.mxu0
        %v2607 = vadd.f32 0.0, %v2606
        %v2608 = vpop.f32.mrf.mxu0
        %v2609 = vadd.f32 0.0, %v2608
        %2610 = vmatmul.bf16.gmra.mxu0 %v2551
        %v2611 = vpop.f32.mrf.mxu0
        %v2612 = vadd.f32 0.0, %v2611
        %v2613 = vpop.f32.mrf.mxu0
        %v2614 = vadd.f32 0.0, %v2613
        %2615 = vmatmul.bf16.gmra.mxu0 %v2554
        %v2616 = vpop.f32.mrf.mxu0
        %v2617 = vadd.f32 0.0, %v2616
        %v2618 = vpop.f32.mrf.mxu0
        %v2619 = vadd.f32 0.0, %v2618
        %2620 = vmatmul.bf16.gmra.mxu0 %v2557
        %v2621 = vpop.f32.mrf.mxu0
        %v2622 = vadd.f32 0.0, %v2621
        %v2623 = vpop.f32.mrf.mxu0
        %v2624 = vadd.f32 0.0, %v2623
        %2625 = vmatmul.bf16.gmra.mxu0 %v2560
        %v2626 = vpop.f32.mrf.mxu0
        %v2627 = vadd.f32 0.0, %v2626
        %v2628 = vpop.f32.mrf.mxu0
        %v2629 = vadd.f32 0.0, %v2628
        %2630 = vmatmul.bf16.gmra.mxu0 %v2563
        %v2631 = vpop.f32.mrf.mxu0
        %v2632 = vadd.f32 0.0, %v2631
        %v2633 = vpop.f32.mrf.mxu0
        %v2634 = vadd.f32 0.0, %v2633
        %2635 = vmatmul.bf16.gmra.mxu0 %v2566
        %v2636 = vpop.f32.mrf.mxu0
        %v2637 = vadd.f32 0.0, %v2636
        %v2638 = vpop.f32.mrf.mxu0
        %v2639 = vadd.f32 0.0, %v2638
        %2640 = vmatmul.bf16.gmra.mxu0 %v2569
        %v2641 = vpop.f32.mrf.mxu0
        %v2642 = vadd.f32 0.0, %v2641
        %v2643 = vpop.f32.mrf.mxu0
        %v2644 = vadd.f32 0.0, %v2643
        %2645 = vmatmul.bf16.gmra.mxu0 %v2572
        %v2646 = vpop.f32.mrf.mxu0
        %v2647 = vadd.f32 0.0, %v2646
        %v2648 = vpop.f32.mrf.mxu0
        %v2649 = vadd.f32 0.0, %v2648
        %2650 = vmatmul.bf16.gmra.mxu0 %v2575
        %v2651 = vpop.f32.mrf.mxu0
        %v2652 = vadd.f32 0.0, %v2651
        %v2653 = vpop.f32.mrf.mxu0
        %v2654 = vadd.f32 0.0, %v2653
        %2655 = vmatmul.bf16.gmra.mxu0 %v2578
        %v2656 = vpop.f32.mrf.mxu0
        %v2657 = vadd.f32 0.0, %v2656
        %v2658 = vpop.f32.mrf.mxu0
        %v2659 = vadd.f32 0.0, %v2658
        %2660 = vmatmul.bf16.gmra.mxu0 %v2581
        %v2661 = vpop.f32.mrf.mxu0
        %v2662 = vadd.f32 0.0, %v2661
        %v2663 = vpop.f32.mrf.mxu0
        %v2664 = vadd.f32 0.0, %v2663
        %2665 = vmatmul.bf16.gmra.mxu0 %v2584
        %v2666 = vpop.f32.mrf.mxu0
        %v2667 = vadd.f32 0.0, %v2666
        %v2668 = vpop.f32.mrf.mxu0
        %v2669 = vadd.f32 0.0, %v2668
        %2670 = vmatmul.bf16.gmra.mxu0 %v2587
        %v2671 = vpop.f32.mrf.mxu0
        %v2672 = vadd.f32 0.0, %v2671
        %v2673 = vpop.f32.mrf.mxu0
        %v2674 = vadd.f32 0.0, %v2673
        %2675 = vmatmul.bf16.gmra.mxu0 %v2590
        %v2676 = vpop.f32.mrf.mxu0
        %v2677 = vadd.f32 0.0, %v2676
        %v2678 = vpop.f32.mrf.mxu0
        %v2679 = vadd.f32 0.0, %v2678
        %2680 = vdwg.mxu0
        %v2681 = vadd.f32 %v2447, %v2602
        %v2682 = vadd.f32 %v2448, %v2604
        %v2683 = vadd.f32 %v2449, %v2607
        %v2684 = vadd.f32 %v2450, %v2609
        %v2685 = vadd.f32 %v2451, %v2612
        %v2686 = vadd.f32 %v2452, %v2614
        %v2687 = vadd.f32 %v2453, %v2617
        %v2688 = vadd.f32 %v2454, %v2619
        %v2689 = vadd.f32 %v2455, %v2622
        %v2690 = vadd.f32 %v2456, %v2624
        %v2691 = vadd.f32 %v2457, %v2627
        %v2692 = vadd.f32 %v2458, %v2629
        %v2693 = vadd.f32 %v2459, %v2632
        %v2694 = vadd.f32 %v2460, %v2634
        %v2695 = vadd.f32 %v2461, %v2637
        %v2696 = vadd.f32 %v2462, %v2639
        %v2697 = vadd.f32 %v2463, %v2642
        %v2698 = vadd.f32 %v2464, %v2644
        %v2699 = vadd.f32 %v2465, %v2647
        %v2700 = vadd.f32 %v2466, %v2649
        %v2701 = vadd.f32 %v2467, %v2652
        %v2702 = vadd.f32 %v2468, %v2654
        %v2703 = vadd.f32 %v2469, %v2657
        %v2704 = vadd.f32 %v2470, %v2659
        %v2705 = vadd.f32 %v2471, %v2662
        %v2706 = vadd.f32 %v2472, %v2664
        %v2707 = vadd.f32 %v2473, %v2667
        %v2708 = vadd.f32 %v2474, %v2669
        %v2709 = vadd.f32 %v2475, %v2672
        %v2710 = vadd.f32 %v2476, %v2674
        %v2711 = vadd.f32 %v2477, %v2677
        %v2712 = vadd.f32 %v2478, %v2679
        %2713 = vst.msk [vmem:[%s244] sm:$0xff] %vm408, %v251
        %2714 = vst.msk [vmem:[%s244 + $0x8] sm:$0xff] %vm408, %v252
        %2715 = vst.msk [vmem:[%s244 + $0x10] sm:$0xff] %vm408, %v253
        %2716 = vst.msk [vmem:[%s244 + $0x18] sm:$0xff] %vm408, %v254
        %2717 = vst.msk [vmem:[%s244 + $0x20] sm:$0xff] %vm408, %v255
        %2718 = vst.msk [vmem:[%s244 + $0x28] sm:$0xff] %vm408, %v256
        %2719 = vst.msk [vmem:[%s244 + $0x30] sm:$0xff] %vm408, %v257
        %2720 = vst.msk [vmem:[%s244 + $0x38] sm:$0xff] %vm408, %v258
        %2721 = vst.msk [vmem:[%s244 + $0x40] sm:$0xff] %vm408, %v259
        %2722 = vst.msk [vmem:[%s244 + $0x48] sm:$0xff] %vm408, %v260
        %2723 = vst.msk [vmem:[%s244 + $0x50] sm:$0xff] %vm408, %v261
        %2724 = vst.msk [vmem:[%s244 + $0x58] sm:$0xff] %vm408, %v262
        %2725 = vst.msk [vmem:[%s244 + $0x60] sm:$0xff] %vm408, %v263
        %2726 = vst.msk [vmem:[%s244 + $0x68] sm:$0xff] %vm408, %v264
        %2727 = vst.msk [vmem:[%s244 + $0x70] sm:$0xff] %vm408, %v265
        %2728 = vst.msk [vmem:[%s244 + $0x78] sm:$0xff] %vm408, %v266
        %2729 = vst.msk [vmem:[%s244 + $0x80] sm:$0xff] %vm408, %v267
        %2730 = vst.msk [vmem:[%s244 + $0x88] sm:$0xff] %vm408, %v268
        %2731 = vst.msk [vmem:[%s244 + $0x90] sm:$0xff] %vm408, %v269
        %2732 = vst.msk [vmem:[%s244 + $0x98] sm:$0xff] %vm408, %v270
        %2733 = vst.msk [vmem:[%s244 + $0xa0] sm:$0xff] %vm408, %v271
        %2734 = vst.msk [vmem:[%s244 + $0xa8] sm:$0xff] %vm408, %v272
        %2735 = vst.msk [vmem:[%s244 + $0xb0] sm:$0xff] %vm408, %v273
        %2736 = vst.msk [vmem:[%s244 + $0xb8] sm:$0xff] %vm408, %v274
        %2737 = vst.msk [vmem:[%s244 + $0xc0] sm:$0xff] %vm408, %v275
        %2738 = vst.msk [vmem:[%s244 + $0xc8] sm:$0xff] %vm408, %v276
        %2739 = vst.msk [vmem:[%s244 + $0xd0] sm:$0xff] %vm408, %v277
        %2740 = vst.msk [vmem:[%s244 + $0xd8] sm:$0xff] %vm408, %v278
        %2741 = vst.msk [vmem:[%s244 + $0xe0] sm:$0xff] %vm408, %v279
        %2742 = vst.msk [vmem:[%s244 + $0xe8] sm:$0xff] %vm408, %v280
        %2743 = vst.msk [vmem:[%s244 + $0xf0] sm:$0xff] %vm408, %v281
        %2744 = vst.msk [vmem:[%s244 + $0xf8] sm:$0xff] %vm408, %v282
        %2777 = vrot.lane.b32.xlu0 %v2681, 8
        %v2778 = vpop.permute.xlu0 %2777
        %2779 = vrot.lane.b32.xlu0 %v2682, 8
        %v2780 = vpop.permute.xlu0 %2779
        %2781 = vrot.lane.b32.xlu0 %v2683, 8
        %v2782 = vpop.permute.xlu0 %2781
        %2783 = vrot.lane.b32.xlu0 %v2684, 8
        %v2784 = vpop.permute.xlu0 %2783
        %2785 = vrot.lane.b32.xlu0 %v2685, 8
        %v2786 = vpop.permute.xlu0 %2785
        %2787 = vrot.lane.b32.xlu0 %v2686, 8
        %v2788 = vpop.permute.xlu0 %2787
        %2789 = vrot.lane.b32.xlu0 %v2687, 8
        %v2790 = vpop.permute.xlu0 %2789
        %2791 = vrot.lane.b32.xlu0 %v2688, 8
        %v2792 = vpop.permute.xlu0 %2791
        %2793 = vrot.lane.b32.xlu0 %v2689, 8
        %v2794 = vpop.permute.xlu0 %2793
        %2795 = vrot.lane.b32.xlu0 %v2690, 8
        %v2796 = vpop.permute.xlu0 %2795
        %2797 = vrot.lane.b32.xlu0 %v2691, 8
        %v2798 = vpop.permute.xlu0 %2797
        %2799 = vrot.lane.b32.xlu0 %v2692, 8
        %v2800 = vpop.permute.xlu0 %2799
        %2801 = vrot.lane.b32.xlu0 %v2693, 8
        %v2802 = vpop.permute.xlu0 %2801
        %2803 = vrot.lane.b32.xlu0 %v2694, 8
        %v2804 = vpop.permute.xlu0 %2803
        %2805 = vrot.lane.b32.xlu0 %v2695, 8
        %v2806 = vpop.permute.xlu0 %2805
        %2807 = vrot.lane.b32.xlu0 %v2696, 8
        %v2808 = vpop.permute.xlu0 %2807
        %2809 = vrot.lane.b32.xlu0 %v2697, 8
        %v2810 = vpop.permute.xlu0 %2809
        %2811 = vrot.lane.b32.xlu0 %v2698, 8
        %v2812 = vpop.permute.xlu0 %2811
        %2813 = vrot.lane.b32.xlu0 %v2699, 8
        %v2814 = vpop.permute.xlu0 %2813
        %2815 = vrot.lane.b32.xlu0 %v2700, 8
        %v2816 = vpop.permute.xlu0 %2815
        %2817 = vrot.lane.b32.xlu0 %v2701, 8
        %v2818 = vpop.permute.xlu0 %2817
        %2819 = vrot.lane.b32.xlu0 %v2702, 8
        %v2820 = vpop.permute.xlu0 %2819
        %2821 = vrot.lane.b32.xlu0 %v2703, 8
        %v2822 = vpop.permute.xlu0 %2821
        %2823 = vrot.lane.b32.xlu0 %v2704, 8
        %v2824 = vpop.permute.xlu0 %2823
        %2825 = vrot.lane.b32.xlu0 %v2705, 8
        %v2826 = vpop.permute.xlu0 %2825
        %2827 = vrot.lane.b32.xlu0 %v2706, 8
        %v2828 = vpop.permute.xlu0 %2827
        %2829 = vrot.lane.b32.xlu0 %v2707, 8
        %v2830 = vpop.permute.xlu0 %2829
        %2831 = vrot.lane.b32.xlu0 %v2708, 8
        %v2832 = vpop.permute.xlu0 %2831
        %2833 = vrot.lane.b32.xlu0 %v2709, 8
        %v2834 = vpop.permute.xlu0 %2833
        %2835 = vrot.lane.b32.xlu0 %v2710, 8
        %v2836 = vpop.permute.xlu0 %2835
        %2837 = vrot.lane.b32.xlu0 %v2711, 8
        %v2838 = vpop.permute.xlu0 %2837
        %2839 = vrot.lane.b32.xlu0 %v2712, 8
        %v2840 = vpop.permute.xlu0 %2839
        %vm2873 = vcmask 130112
        %2874 = vst.msk [vmem:[%s244] sm:$0xff] %vm2873, %v2778
        %2875 = vst.msk [vmem:[%s244 + $0x8] sm:$0xff] %vm2873, %v2780
        %2876 = vst.msk [vmem:[%s244 + $0x10] sm:$0xff] %vm2873, %v2782
        %2877 = vst.msk [vmem:[%s244 + $0x18] sm:$0xff] %vm2873, %v2784
        %2878 = vst.msk [vmem:[%s244 + $0x20] sm:$0xff] %vm2873, %v2786
        %2879 = vst.msk [vmem:[%s244 + $0x28] sm:$0xff] %vm2873, %v2788
        %2880 = vst.msk [vmem:[%s244 + $0x30] sm:$0xff] %vm2873, %v2790
        %2881 = vst.msk [vmem:[%s244 + $0x38] sm:$0xff] %vm2873, %v2792
        %2882 = vst.msk [vmem:[%s244 + $0x40] sm:$0xff] %vm2873, %v2794
        %2883 = vst.msk [vmem:[%s244 + $0x48] sm:$0xff] %vm2873, %v2796
        %2884 = vst.msk [vmem:[%s244 + $0x50] sm:$0xff] %vm2873, %v2798
        %2885 = vst.msk [vmem:[%s244 + $0x58] sm:$0xff] %vm2873, %v2800
        %2886 = vst.msk [vmem:[%s244 + $0x60] sm:$0xff] %vm2873, %v2802
        %2887 = vst.msk [vmem:[%s244 + $0x68] sm:$0xff] %vm2873, %v2804
        %2888 = vst.msk [vmem:[%s244 + $0x70] sm:$0xff] %vm2873, %v2806
        %2889 = vst.msk [vmem:[%s244 + $0x78] sm:$0xff] %vm2873, %v2808
        %2890 = vst.msk [vmem:[%s244 + $0x80] sm:$0xff] %vm2873, %v2810
        %2891 = vst.msk [vmem:[%s244 + $0x88] sm:$0xff] %vm2873, %v2812
        %2892 = vst.msk [vmem:[%s244 + $0x90] sm:$0xff] %vm2873, %v2814
        %2893 = vst.msk [vmem:[%s244 + $0x98] sm:$0xff] %vm2873, %v2816
        %2894 = vst.msk [vmem:[%s244 + $0xa0] sm:$0xff] %vm2873, %v2818
        %2895 = vst.msk [vmem:[%s244 + $0xa8] sm:$0xff] %vm2873, %v2820
        %2896 = vst.msk [vmem:[%s244 + $0xb0] sm:$0xff] %vm2873, %v2822
        %2897 = vst.msk [vmem:[%s244 + $0xb8] sm:$0xff] %vm2873, %v2824
        %2898 = vst.msk [vmem:[%s244 + $0xc0] sm:$0xff] %vm2873, %v2826
        %2899 = vst.msk [vmem:[%s244 + $0xc8] sm:$0xff] %vm2873, %v2828
        %2900 = vst.msk [vmem:[%s244 + $0xd0] sm:$0xff] %vm2873, %v2830
        %2901 = vst.msk [vmem:[%s244 + $0xd8] sm:$0xff] %vm2873, %v2832
        %2902 = vst.msk [vmem:[%s244 + $0xe0] sm:$0xff] %vm2873, %v2834
        %2903 = vst.msk [vmem:[%s244 + $0xe8] sm:$0xff] %vm2873, %v2836
        %2904 = vst.msk [vmem:[%s244 + $0xf0] sm:$0xff] %vm2873, %v2838
        %2905 = vst.msk [vmem:[%s244 + $0xf8] sm:$0xff] %vm2873, %v2840
        %s2906 = sand.u32 %s159, 1
        %s2907 = scalar_lea.sflag [#allocation4], %s2906
        %s2908 = sand.u32 %s159, 1
        %s2909 = smul.addr %s2908, 256
        %s2910 = scalar_lea.vmem [#allocation3], %s2909
        // Predicated region
        $region45: #{tpu_custom_call.1} parent=43 // pred_check
          %p2911 = pneg %p169
        $region46: #{tpu_custom_call.1} parent=43 // pred_check_branch
          %2913 = sbr.rel (%p2911) target = $region48
        $region47: #{tpu_custom_call.1} parent=43 // pred_region
          %2915 = vsyncadd %s2907, 0
          %s2916 = smul.addr %s20, 32
          %s2917 = smul.addr %s2916, 8
          %s2918 = scalar_lea.hbm %s6, %s2917
          %s2919 = sshll.u32 %s2910, 4
          %s2920 = int_to_ptr.vmem [resolvable:$true] %s2919
          %s2921 = sshll.u32 %s2918, 4
          %s2922 = int_to_ptr.hbm [resolvable:$true] %s2921
          %2927 = dma.vmem_to_hbm [thread:$0]  %s2920, 4096, %s2922, %s2907, 128, 128, 8
        $region48: #{tpu_custom_call.1} parent=43 // pred_fallthru
          _
      $region44: #{tpu_custom_call.1} parent=5 // pred_fallthru
        _
      %p2928 = scmp.le.s32.totalorder 2, %s15
      // Predicated region
      $region49: #{tpu_custom_call.1} parent=5 // pred_check
        %p2929 = pneg %p2928
      $region50: #{tpu_custom_call.1} parent=5 // pred_check_branch
        %2931 = sbr.rel (%p2929) target = $region52
      $region51: #{tpu_custom_call.1} parent=5 // pred_region
        %s2932 = ssub.s32 %s15, 2
        // Predicated region
        $region53: #{tpu_custom_call.1} parent=51 // pred_check
          %p2933 = pneg %p175
        $region54: #{tpu_custom_call.1} parent=51 // pred_check_branch
          %2935 = sbr.rel (%p2933) target = $region56
        $region55: #{tpu_custom_call.1} parent=51 // pred_region
          %s2936 = sand.u32 %s160, 1
          %s2937 = scalar_lea.sflag [#allocation4], %s2936
          %s2938 = sand.u32 %s160, 1
          %s2939 = smul.addr %s2938, 256
          %s2940 = scalar_lea.vmem [#allocation3], %s2939
          %2942 = dma.done %s2937, 4096
        $region56: #{tpu_custom_call.1} parent=51 // pred_fallthru
          _
      $region52: #{tpu_custom_call.1} parent=5 // pred_fallthru
        _
    $region6: #{tpu_custom_call.1} parent=1 // loop_footer
      %s19 = sadd.s32 1, %s15
    $region7: #{tpu_custom_call.1} parent=1 // loop_footer_branch
      %14 = sbr.rel target = $region3
    $region8: #{tpu_custom_call.1} parent=1 // loop_exit
      _
    %2943 = vsyncpa [#allocation4], 1
    %s2944 = scalar_lea.sflag [#allocation4], 1
    %2945 = vsyncpa %s2944, 1

</llo_original>
